<compile_context>
chip_gen: v7x
topology: tpu7x:2x2x1
jax: 0.10.0
libtpu: 0.0.40
codegen_flags: <defaults>
</compile_context>

<pallas_src>
import functools

import jax
import jax.numpy as jnp
from jax.experimental import pallas as pl
from jax.experimental.pallas import tpu as pltpu

TB = 8  # batch tile (one sublane tile of rows per grid step)


def lstm_fc_kernel(x_ref, wx_ref, wh_ref, b_ref, wfc_ref, bfc_ref, out_ref, xproj_ref):
    """One batch tile: full LSTM recurrence over T steps + final Linear.

    x_ref   : (T, TB, Ip)   bf16, time-major, batch/input zero-padded
    wx_ref  : (Ip, 4*HG)    bf16 fused input->hidden weights, each gate lane-padded to HG=128
    wh_ref  : (HG, 4*HG)    bf16 fused hidden->hidden weights
    b_ref   : (1, 4*HG)     f32 combined bias (bias_ih + bias_hh), lane-padded per gate
    wfc_ref : (HG, OP)      bf16 final linear weight (transposed, zero-padded)
    bfc_ref : (1, OP)       f32 final linear bias (zero-padded)
    out_ref : (TB, OP)      f32 lane-dense padded predictions (wrapper slices to (B, O))
    xproj_ref: (T*TB, 4*HG) f32 VMEM scratch holding the hoisted input projection
    """
    T, TBk, Ip = x_ref.shape
    G4 = wh_ref.shape[1]          # 4 * HG
    HG = G4 // 4                  # lane-padded per-gate hidden size (128)

    # ---- hoisted input projection: one bf16 matmul for all T steps, bias folded in ----
    # Parked in VMEM scratch so it doesn't sit in vregs across the whole unrolled loop.
    x_flat = x_ref[...].reshape(T * TBk, Ip)
    xproj_ref[...] = (
        jnp.dot(x_flat, wx_ref[...], preferred_element_type=jnp.float32) + b_ref[...]
    )

    wh = wh_ref[...]  # (HG, 4*HG) bf16, loop-invariant
    # TODO(synk): hold wh resident in the MXU across the 8 steps via pltpu.matmul_push_rhs /
    # matmul_acc_lhs / matmul_pop instead of re-staging the RHS every serialized step.

    def sigmoid(z):
        # tanh form keeps each gate's transcendental on the EUP slot (no VPU divide).
        return 0.5 * jnp.tanh(0.5 * z) + 0.5

    h = jnp.zeros((TBk, HG), jnp.float32)
    c = jnp.zeros((TBk, HG), jnp.float32)

    # Fully-unrolled recurrence (T is static and small): one fused bf16 (TB,HG)x(HG,4*HG) MXU
    # matmul per step, 128-aligned gate slices, f32 elementwise math; padded lanes stay zero.
    for t in range(T):
        gates = xproj_ref[pl.ds(t * TBk, TBk), :] + jnp.dot(
            h.astype(jnp.bfloat16), wh, preferred_element_type=jnp.float32)
        i_g = sigmoid(gates[:, 0 * HG:1 * HG])
        f_g = sigmoid(gates[:, 1 * HG:2 * HG])
        g_g = jnp.tanh(gates[:, 2 * HG:3 * HG])
        o_g = sigmoid(gates[:, 3 * HG:4 * HG])
        c = f_g * c + i_g * g_g
        h = o_g * jnp.tanh(c)

    # Dropout is identity in eval mode.
    # TODO(synk): training-mode dropout would need pltpu.prng_seed / stateful_bernoulli.
    out_ref[...] = (
        jnp.dot(h.astype(jnp.bfloat16), wfc_ref[...], preferred_element_type=jnp.float32)
        + bfc_ref[...])


@functools.partial(jax.jit, static_argnames=("output_size",))
def prediction_model_forward(x, wx, wh, b, wfc, bfc, *, output_size=1):
    """x: (B, T, I) batch_first (PyTorch convention). Returns (B, output_size) f32."""
    B, T, I = x.shape
    Bp = ((B + TB - 1) // TB) * TB             # pad batch to a sublane-tile multiple
    Ip = wx.shape[0]                           # padded input size (sublane-aligned)
    G4 = wh.shape[1]                           # 4 * HG
    HG = wh.shape[0]                           # lane-padded per-gate hidden (128)
    OP = wfc.shape[1]                          # lane-padded output width

    x_tm = jnp.transpose(x, (1, 0, 2)).astype(jnp.bfloat16)         # (T, B, I)
    x_tm = jnp.pad(x_tm, ((0, 0), (0, Bp - B), (0, Ip - I)))        # (T, Bp, Ip)

    out_p = pl.pallas_call(
        lstm_fc_kernel,
        out_shape=jax.ShapeDtypeStruct((Bp, OP), jnp.float32),
        grid=(Bp // TB,),
        in_specs=[
            pl.BlockSpec((T, TB, Ip), lambda i: (0, i, 0)),   # x: tile over batch
            pl.BlockSpec((Ip, G4), lambda i: (0, 0)),         # wx (loop/grid invariant)
            pl.BlockSpec((HG, G4), lambda i: (0, 0)),         # wh
            pl.BlockSpec((1, G4), lambda i: (0, 0)),          # combined bias
            pl.BlockSpec((HG, OP), lambda i: (0, 0)),         # fc weight
            pl.BlockSpec((1, OP), lambda i: (0, 0)),          # fc bias
        ],
        out_specs=pl.BlockSpec((TB, OP), lambda i: (i, 0)),
        scratch_shapes=[pltpu.VMEM((T * TB, G4), jnp.float32)],
        compiler_params=pltpu.CompilerParams(dimension_semantics=("parallel",)),
    )(x_tm, wx, wh, b, wfc, bfc)
    return out_p[:B, :output_size]


def init_params(key, input_size=2, hidden_size=50, output_size=1):
    """Deterministic init mirroring nn.LSTM / nn.Linear default U(-1/sqrt(H), 1/sqrt(H))."""
    k = 1.0 / jnp.sqrt(jnp.float32(hidden_size))
    keys = jax.random.split(key, 6)
    weight_ih = jax.random.uniform(keys[0], (4 * hidden_size, input_size), jnp.float32, -k, k)
    weight_hh = jax.random.uniform(keys[1], (4 * hidden_size, hidden_size), jnp.float32, -k, k)
    bias_ih = jax.random.uniform(keys[2], (4 * hidden_size,), jnp.float32, -k, k)
    bias_hh = jax.random.uniform(keys[3], (4 * hidden_size,), jnp.float32, -k, k)
    fc_w = jax.random.uniform(keys[4], (output_size, hidden_size), jnp.float32, -k, k)
    fc_b = jax.random.uniform(keys[5], (output_size,), jnp.float32, -k, k)
    return weight_ih, weight_hh, bias_ih, bias_hh, fc_w, fc_b


def pack_params(weight_ih, weight_hh, bias_ih, bias_hh, fc_w, fc_b,
                hidden_size, input_size, output_size,
                hg=128, ip=8, op=128):
    """Repack PyTorch-convention LSTM/Linear weights into fused, tile-padded kernel layouts.

    Matmul operands (wx/wh/wfc) are bf16 (single-pass MXU, half the weight DMA/vregs); biases
    stay f32 and are added post-accumulation. All padding is zeros, which keeps the padded
    lanes of h/c exactly zero through the whole recurrence (sigmoid(0)=0.5 only multiplies 0,
    tanh(0)=0), so padding never changes the math.
    """
    H, I, O = hidden_size, input_size, output_size

    # input->hidden: (4H, I) -> per-gate (I, H) -> pad -> concat along lanes -> (Ip, 4*HG)
    w_ih_g = jnp.transpose(weight_ih.reshape(4, H, I), (0, 2, 1))        # (4, I, H)
    w_ih_g = jnp.pad(w_ih_g, ((0, 0), (0, ip - I), (0, hg - H)))         # (4, Ip, HG)
    wx = jnp.concatenate([w_ih_g[k] for k in range(4)], axis=1).astype(jnp.bfloat16)

    # hidden->hidden: (4H, H) -> per-gate (H_in, H_out) -> pad -> concat -> (HG, 4*HG)
    w_hh_g = jnp.transpose(weight_hh.reshape(4, H, H), (0, 2, 1))        # (4, H_in, H_out)
    w_hh_g = jnp.pad(w_hh_g, ((0, 0), (0, hg - H), (0, hg - H)))         # (4, HG, HG)
    wh = jnp.concatenate([w_hh_g[k] for k in range(4)], axis=1).astype(jnp.bfloat16)

    # combined bias, lane-padded per gate, folded into the x-projection in the kernel (f32)
    b_g = jnp.pad((bias_ih + bias_hh).reshape(4, H), ((0, 0), (0, hg - H)))  # (4, HG)
    b = b_g.reshape(1, 4 * hg).astype(jnp.float32)                           # (1, 4*HG)

    wfc = jnp.pad(fc_w.T, ((0, hg - H), (0, op - O))).astype(jnp.bfloat16)   # (HG, OP)
    bfc = jnp.pad(fc_b.reshape(1, O), ((0, 0), (0, op - O))).astype(jnp.float32)  # (1, OP)
    return wx, wh, b, wfc, bfc


def reference_forward(x, weight_ih, weight_hh, bias_ih, bias_hh, fc_w, fc_b):
    """Pure-JAX reference matching torch.nn.LSTM + Linear (eval mode), full f32 precision."""
    B, T, _ = x.shape
    H = weight_hh.shape[1]
    hp = jax.lax.Precision.HIGHEST   # high precision only in the reference, not the kernel
    h = jnp.zeros((B, H), jnp.float32)
    c = jnp.zeros((B, H), jnp.float32)
    for t in range(T):
        gates = (jnp.dot(x[:, t, :], weight_ih.T, precision=hp)
                 + jnp.dot(h, weight_hh.T, precision=hp)
                 + bias_ih + bias_hh)
        i_g, f_g, g_g, o_g = jnp.split(gates, 4, axis=1)
        i_g = jax.nn.sigmoid(i_g)
        f_g = jax.nn.sigmoid(f_g)
        g_g = jnp.tanh(g_g)
        o_g = jax.nn.sigmoid(o_g)
        c = f_g * c + i_g * g_g
        h = o_g * jnp.tanh(c)
    return jnp.dot(h, fc_w.T, precision=hp) + fc_b


if __name__ == "__main__":
    INPUT_SIZE = 2
    HIDDEN_SIZE = 50
    OUTPUT_SIZE = 1
    BATCH = 4
    SEQ = 8

    key = jax.random.PRNGKey(0)
    k_x, k_p = jax.random.split(key)

    x = jax.random.normal(k_x, (BATCH, SEQ, INPUT_SIZE), dtype=jnp.float32)

    weight_ih, weight_hh, bias_ih, bias_hh, fc_w, fc_b = init_params(
        k_p, INPUT_SIZE, HIDDEN_SIZE, OUTPUT_SIZE)
    wx, wh, b, wfc, bfc = pack_params(
        weight_ih, weight_hh, bias_ih, bias_hh, fc_w, fc_b,
        HIDDEN_SIZE, INPUT_SIZE, OUTPUT_SIZE)

    out = prediction_model_forward(x, wx, wh, b, wfc, bfc, output_size=OUTPUT_SIZE)
    out = jax.block_until_ready(out)

    ref = reference_forward(x, weight_ih, weight_hh, bias_ih, bias_hh, fc_w, fc_b)
    assert out.shape == (BATCH, OUTPUT_SIZE), out.shape
    # Tolerance accounts for the intentional bf16 matmul operands in the kernel.
    assert jnp.allclose(out, ref, rtol=3e-2, atol=3e-2), (out, ref)

    print("KERNEL_OK")
</pallas_src>

<mosaic_0001>
module attributes {stable_mosaic.version = 11 : i64} {
  func.func @lstm_fc_kernel(%arg0: i32, %arg1: memref<8x8x8xbf16, #tpu.memory_space<vmem>>, %arg2: memref<8x512xbf16, #tpu.memory_space<vmem>>, %arg3: memref<128x512xbf16, #tpu.memory_space<vmem>>, %arg4: memref<1x512xf32, #tpu.memory_space<vmem>>, %arg5: memref<128x128xbf16, #tpu.memory_space<vmem>>, %arg6: memref<1x128xf32, #tpu.memory_space<vmem>>, %arg7: memref<8x128xf32, #tpu.memory_space<vmem>>, %arg8: memref<64x512xf32, #tpu.memory_space<vmem>>) attributes {dimension_semantics = [#tpu.dimension_semantics<parallel>], iteration_bounds = array<i64: 1>, scalar_prefetch = 0 : i64, scratch_operands = 1 : i64, tpu.core_type = #tpu.core_type<tc>, window_params = [{transform_indices = @transform_0, window_bounds = array<i64: 8, 8, 8>}, {pipeline_mode = #tpu.pipeline_mode<synchronous>, transform_indices = @transform_1, window_bounds = array<i64: 8, 512>}, {pipeline_mode = #tpu.pipeline_mode<synchronous>, transform_indices = @transform_2, window_bounds = array<i64: 128, 512>}, {pipeline_mode = #tpu.pipeline_mode<synchronous>, transform_indices = @transform_3, window_bounds = array<i64: 1, 512>}, {pipeline_mode = #tpu.pipeline_mode<synchronous>, transform_indices = @transform_4, window_bounds = array<i64: 128, 128>}, {pipeline_mode = #tpu.pipeline_mode<synchronous>, transform_indices = @transform_5, window_bounds = array<i64: 1, 128>}, {transform_indices = @transform_6, window_bounds = array<i64: 8, 128>}]} {
    %c0 = arith.constant 0 : index
    %c0_0 = arith.constant 0 : index
    %c0_1 = arith.constant 0 : index
    %0 = vector.load %arg1[%c0, %c0_0, %c0_1] : memref<8x8x8xbf16, #tpu.memory_space<vmem>>, vector<8x8x8xbf16>
    %1 = vector.shape_cast %0 : vector<8x8x8xbf16> to vector<64x8xbf16>
    %c0_2 = arith.constant 0 : index
    %c0_3 = arith.constant 0 : index
    %2 = vector.load %arg2[%c0_2, %c0_3] : memref<8x512xbf16, #tpu.memory_space<vmem>>, vector<8x512xbf16>
    %cst = arith.constant dense<0.000000e+00> : vector<64x512xf32>
    %3 = tpu.matmul %1, %2, %cst {dimension_numbers = #tpu.dot_dimension_numbers<[1], [0], [0], [1], [0, 0, 1, 1], [], []>} : vector<64x8xbf16>, vector<8x512xbf16>, vector<64x512xf32> -> vector<64x512xf32>
    %c0_4 = arith.constant 0 : index
    %c0_5 = arith.constant 0 : index
    %4 = vector.load %arg4[%c0_4, %c0_5] : memref<1x512xf32, #tpu.memory_space<vmem>>, vector<1x512xf32>
    %5 = vector.broadcast %4 : vector<1x512xf32> to vector<64x512xf32>
    %6 = arith.addf %3, %5 : vector<64x512xf32>
    %c0_6 = arith.constant 0 : index
    %c0_7 = arith.constant 0 : index
    %7 = vector.load %arg8[%c0_6, %c0_7] : memref<64x512xf32, #tpu.memory_space<vmem>>, vector<64x512xf32>
    tpu.vector_store %arg8[%c0_6, %c0_7], %6 {strides = array<i32>} : memref<64x512xf32, #tpu.memory_space<vmem>>, vector<64x512xf32>,
    %c0_8 = arith.constant 0 : index
    %c0_9 = arith.constant 0 : index
    %8 = vector.load %arg3[%c0_8, %c0_9] : memref<128x512xbf16, #tpu.memory_space<vmem>>, vector<128x512xbf16>
    %cst_10 = arith.constant 0.000000e+00 : f32
    %9 = vector.broadcast %cst_10 : f32 to vector<8x128xf32>
    %cst_11 = arith.constant 0.000000e+00 : f32
    %10 = vector.broadcast %cst_11 : f32 to vector<8x128xf32>
    %c0_12 = arith.constant 0 : index
    %c0_13 = arith.constant 0 : index
    %11 = vector.load %arg8[%c0_12, %c0_13] : memref<64x512xf32, #tpu.memory_space<vmem>>, vector<8x512xf32>
    %12 = arith.truncf %9 : vector<8x128xf32> to vector<8x128xbf16>
    %cst_14 = arith.constant dense<0.000000e+00> : vector<8x512xf32>
    %13 = tpu.matmul %12, %8, %cst_14 {dimension_numbers = #tpu.dot_dimension_numbers<[1], [0], [0], [1], [0, 0, 1, 1], [], []>} : vector<8x128xbf16>, vector<128x512xbf16>, vector<8x512xf32> -> vector<8x512xf32>
    %14 = arith.addf %11, %13 : vector<8x512xf32>
    %15 = vector.extract_strided_slice %14 {offsets = [0, 0], sizes = [8, 128], strides = [1, 1]} : vector<8x512xf32> to vector<8x128xf32>
    %cst_15 = arith.constant 5.000000e-01 : f32
    %16 = vector.broadcast %cst_15 : f32 to vector<8x128xf32>
    %17 = arith.mulf %16, %15 : vector<8x128xf32>
    %18 = math.tanh %17 : vector<8x128xf32>
    %cst_16 = arith.constant 5.000000e-01 : f32
    %19 = vector.broadcast %cst_16 : f32 to vector<8x128xf32>
    %20 = arith.mulf %19, %18 : vector<8x128xf32>
    %cst_17 = arith.constant 5.000000e-01 : f32
    %21 = vector.broadcast %cst_17 : f32 to vector<8x128xf32>
    %22 = arith.addf %20, %21 : vector<8x128xf32>
    %23 = vector.extract_strided_slice %14 {offsets = [0, 128], sizes = [8, 128], strides = [1, 1]} : vector<8x512xf32> to vector<8x128xf32>
    %cst_18 = arith.constant 5.000000e-01 : f32
    %24 = vector.broadcast %cst_18 : f32 to vector<8x128xf32>
    %25 = arith.mulf %24, %23 : vector<8x128xf32>
    %26 = math.tanh %25 : vector<8x128xf32>
    %cst_19 = arith.constant 5.000000e-01 : f32
    %27 = vector.broadcast %cst_19 : f32 to vector<8x128xf32>
    %28 = arith.mulf %27, %26 : vector<8x128xf32>
    %cst_20 = arith.constant 5.000000e-01 : f32
    %29 = vector.broadcast %cst_20 : f32 to vector<8x128xf32>
    %30 = arith.addf %28, %29 : vector<8x128xf32>
    %31 = vector.extract_strided_slice %14 {offsets = [0, 256], sizes = [8, 128], strides = [1, 1]} : vector<8x512xf32> to vector<8x128xf32>
    %32 = math.tanh %31 : vector<8x128xf32>
    %33 = vector.extract_strided_slice %14 {offsets = [0, 384], sizes = [8, 128], strides = [1, 1]} : vector<8x512xf32> to vector<8x128xf32>
    %cst_21 = arith.constant 5.000000e-01 : f32
    %34 = vector.broadcast %cst_21 : f32 to vector<8x128xf32>
    %35 = arith.mulf %34, %33 : vector<8x128xf32>
    %36 = math.tanh %35 : vector<8x128xf32>
    %cst_22 = arith.constant 5.000000e-01 : f32
    %37 = vector.broadcast %cst_22 : f32 to vector<8x128xf32>
    %38 = arith.mulf %37, %36 : vector<8x128xf32>
    %cst_23 = arith.constant 5.000000e-01 : f32
    %39 = vector.broadcast %cst_23 : f32 to vector<8x128xf32>
    %40 = arith.addf %38, %39 : vector<8x128xf32>
    %41 = arith.mulf %30, %10 : vector<8x128xf32>
    %42 = arith.mulf %22, %32 : vector<8x128xf32>
    %43 = arith.addf %41, %42 : vector<8x128xf32>
    %44 = math.tanh %43 : vector<8x128xf32>
    %45 = arith.mulf %40, %44 : vector<8x128xf32>
    %c8 = arith.constant 8 : index
    %c0_24 = arith.constant 0 : index
    %46 = vector.load %arg8[%c8, %c0_24] : memref<64x512xf32, #tpu.memory_space<vmem>>, vector<8x512xf32>
    %47 = arith.truncf %45 : vector<8x128xf32> to vector<8x128xbf16>
    %cst_25 = arith.constant dense<0.000000e+00> : vector<8x512xf32>
    %48 = tpu.matmul %47, %8, %cst_25 {dimension_numbers = #tpu.dot_dimension_numbers<[1], [0], [0], [1], [0, 0, 1, 1], [], []>} : vector<8x128xbf16>, vector<128x512xbf16>, vector<8x512xf32> -> vector<8x512xf32>
    %49 = arith.addf %46, %48 : vector<8x512xf32>
    %50 = vector.extract_strided_slice %49 {offsets = [0, 0], sizes = [8, 128], strides = [1, 1]} : vector<8x512xf32> to vector<8x128xf32>
    %cst_26 = arith.constant 5.000000e-01 : f32
    %51 = vector.broadcast %cst_26 : f32 to vector<8x128xf32>
    %52 = arith.mulf %51, %50 : vector<8x128xf32>
    %53 = math.tanh %52 : vector<8x128xf32>
    %cst_27 = arith.constant 5.000000e-01 : f32
    %54 = vector.broadcast %cst_27 : f32 to vector<8x128xf32>
    %55 = arith.mulf %54, %53 : vector<8x128xf32>
    %cst_28 = arith.constant 5.000000e-01 : f32
    %56 = vector.broadcast %cst_28 : f32 to vector<8x128xf32>
    %57 = arith.addf %55, %56 : vector<8x128xf32>
    %58 = vector.extract_strided_slice %49 {offsets = [0, 128], sizes = [8, 128], strides = [1, 1]} : vector<8x512xf32> to vector<8x128xf32>
    %cst_29 = arith.constant 5.000000e-01 : f32
    %59 = vector.broadcast %cst_29 : f32 to vector<8x128xf32>
    %60 = arith.mulf %59, %58 : vector<8x128xf32>
    %61 = math.tanh %60 : vector<8x128xf32>
    %cst_30 = arith.constant 5.000000e-01 : f32
    %62 = vector.broadcast %cst_30 : f32 to vector<8x128xf32>
    %63 = arith.mulf %62, %61 : vector<8x128xf32>
    %cst_31 = arith.constant 5.000000e-01 : f32
    %64 = vector.broadcast %cst_31 : f32 to vector<8x128xf32>
    %65 = arith.addf %63, %64 : vector<8x128xf32>
    %66 = vector.extract_strided_slice %49 {offsets = [0, 256], sizes = [8, 128], strides = [1, 1]} : vector<8x512xf32> to vector<8x128xf32>
    %67 = math.tanh %66 : vector<8x128xf32>
    %68 = vector.extract_strided_slice %49 {offsets = [0, 384], sizes = [8, 128], strides = [1, 1]} : vector<8x512xf32> to vector<8x128xf32>
    %cst_32 = arith.constant 5.000000e-01 : f32
    %69 = vector.broadcast %cst_32 : f32 to vector<8x128xf32>
    %70 = arith.mulf %69, %68 : vector<8x128xf32>
    %71 = math.tanh %70 : vector<8x128xf32>
    %cst_33 = arith.constant 5.000000e-01 : f32
    %72 = vector.broadcast %cst_33 : f32 to vector<8x128xf32>
    %73 = arith.mulf %72, %71 : vector<8x128xf32>
    %cst_34 = arith.constant 5.000000e-01 : f32
    %74 = vector.broadcast %cst_34 : f32 to vector<8x128xf32>
    %75 = arith.addf %73, %74 : vector<8x128xf32>
    %76 = arith.mulf %65, %43 : vector<8x128xf32>
    %77 = arith.mulf %57, %67 : vector<8x128xf32>
    %78 = arith.addf %76, %77 : vector<8x128xf32>
    %79 = math.tanh %78 : vector<8x128xf32>
    %80 = arith.mulf %75, %79 : vector<8x128xf32>
    %c16 = arith.constant 16 : index
    %c0_35 = arith.constant 0 : index
    %81 = vector.load %arg8[%c16, %c0_35] : memref<64x512xf32, #tpu.memory_space<vmem>>, vector<8x512xf32>
    %82 = arith.truncf %80 : vector<8x128xf32> to vector<8x128xbf16>
    %cst_36 = arith.constant dense<0.000000e+00> : vector<8x512xf32>
    %83 = tpu.matmul %82, %8, %cst_36 {dimension_numbers = #tpu.dot_dimension_numbers<[1], [0], [0], [1], [0, 0, 1, 1], [], []>} : vector<8x128xbf16>, vector<128x512xbf16>, vector<8x512xf32> -> vector<8x512xf32>
    %84 = arith.addf %81, %83 : vector<8x512xf32>
    %85 = vector.extract_strided_slice %84 {offsets = [0, 0], sizes = [8, 128], strides = [1, 1]} : vector<8x512xf32> to vector<8x128xf32>
    %cst_37 = arith.constant 5.000000e-01 : f32
    %86 = vector.broadcast %cst_37 : f32 to vector<8x128xf32>
    %87 = arith.mulf %86, %85 : vector<8x128xf32>
    %88 = math.tanh %87 : vector<8x128xf32>
    %cst_38 = arith.constant 5.000000e-01 : f32
    %89 = vector.broadcast %cst_38 : f32 to vector<8x128xf32>
    %90 = arith.mulf %89, %88 : vector<8x128xf32>
    %cst_39 = arith.constant 5.000000e-01 : f32
    %91 = vector.broadcast %cst_39 : f32 to vector<8x128xf32>
    %92 = arith.addf %90, %91 : vector<8x128xf32>
    %93 = vector.extract_strided_slice %84 {offsets = [0, 128], sizes = [8, 128], strides = [1, 1]} : vector<8x512xf32> to vector<8x128xf32>
    %cst_40 = arith.constant 5.000000e-01 : f32
    %94 = vector.broadcast %cst_40 : f32 to vector<8x128xf32>
    %95 = arith.mulf %94, %93 : vector<8x128xf32>
    %96 = math.tanh %95 : vector<8x128xf32>
    %cst_41 = arith.constant 5.000000e-01 : f32
    %97 = vector.broadcast %cst_41 : f32 to vector<8x128xf32>
    %98 = arith.mulf %97, %96 : vector<8x128xf32>
    %cst_42 = arith.constant 5.000000e-01 : f32
    %99 = vector.broadcast %cst_42 : f32 to vector<8x128xf32>
    %100 = arith.addf %98, %99 : vector<8x128xf32>
    %101 = vector.extract_strided_slice %84 {offsets = [0, 256], sizes = [8, 128], strides = [1, 1]} : vector<8x512xf32> to vector<8x128xf32>
    %102 = math.tanh %101 : vector<8x128xf32>
    %103 = vector.extract_strided_slice %84 {offsets = [0, 384], sizes = [8, 128], strides = [1, 1]} : vector<8x512xf32> to vector<8x128xf32>
    %cst_43 = arith.constant 5.000000e-01 : f32
    %104 = vector.broadcast %cst_43 : f32 to vector<8x128xf32>
    %105 = arith.mulf %104, %103 : vector<8x128xf32>
    %106 = math.tanh %105 : vector<8x128xf32>
    %cst_44 = arith.constant 5.000000e-01 : f32
    %107 = vector.broadcast %cst_44 : f32 to vector<8x128xf32>
    %108 = arith.mulf %107, %106 : vector<8x128xf32>
    %cst_45 = arith.constant 5.000000e-01 : f32
    %109 = vector.broadcast %cst_45 : f32 to vector<8x128xf32>
    %110 = arith.addf %108, %109 : vector<8x128xf32>
    %111 = arith.mulf %100, %78 : vector<8x128xf32>
    %112 = arith.mulf %92, %102 : vector<8x128xf32>
    %113 = arith.addf %111, %112 : vector<8x128xf32>
    %114 = math.tanh %113 : vector<8x128xf32>
    %115 = arith.mulf %110, %114 : vector<8x128xf32>
    %c24 = arith.constant 24 : index
    %c0_46 = arith.constant 0 : index
    %116 = vector.load %arg8[%c24, %c0_46] : memref<64x512xf32, #tpu.memory_space<vmem>>, vector<8x512xf32>
    %117 = arith.truncf %115 : vector<8x128xf32> to vector<8x128xbf16>
    %cst_47 = arith.constant dense<0.000000e+00> : vector<8x512xf32>
    %118 = tpu.matmul %117, %8, %cst_47 {dimension_numbers = #tpu.dot_dimension_numbers<[1], [0], [0], [1], [0, 0, 1, 1], [], []>} : vector<8x128xbf16>, vector<128x512xbf16>, vector<8x512xf32> -> vector<8x512xf32>
    %119 = arith.addf %116, %118 : vector<8x512xf32>
    %120 = vector.extract_strided_slice %119 {offsets = [0, 0], sizes = [8, 128], strides = [1, 1]} : vector<8x512xf32> to vector<8x128xf32>
    %cst_48 = arith.constant 5.000000e-01 : f32
    %121 = vector.broadcast %cst_48 : f32 to vector<8x128xf32>
    %122 = arith.mulf %121, %120 : vector<8x128xf32>
    %123 = math.tanh %122 : vector<8x128xf32>
    %cst_49 = arith.constant 5.000000e-01 : f32
    %124 = vector.broadcast %cst_49 : f32 to vector<8x128xf32>
    %125 = arith.mulf %124, %123 : vector<8x128xf32>
    %cst_50 = arith.constant 5.000000e-01 : f32
    %126 = vector.broadcast %cst_50 : f32 to vector<8x128xf32>
    %127 = arith.addf %125, %126 : vector<8x128xf32>
    %128 = vector.extract_strided_slice %119 {offsets = [0, 128], sizes = [8, 128], strides = [1, 1]} : vector<8x512xf32> to vector<8x128xf32>
    %cst_51 = arith.constant 5.000000e-01 : f32
    %129 = vector.broadcast %cst_51 : f32 to vector<8x128xf32>
    %130 = arith.mulf %129, %128 : vector<8x128xf32>
    %131 = math.tanh %130 : vector<8x128xf32>
    %cst_52 = arith.constant 5.000000e-01 : f32
    %132 = vector.broadcast %cst_52 : f32 to vector<8x128xf32>
    %133 = arith.mulf %132, %131 : vector<8x128xf32>
    %cst_53 = arith.constant 5.000000e-01 : f32
    %134 = vector.broadcast %cst_53 : f32 to vector<8x128xf32>
    %135 = arith.addf %133, %134 : vector<8x128xf32>
    %136 = vector.extract_strided_slice %119 {offsets = [0, 256], sizes = [8, 128], strides = [1, 1]} : vector<8x512xf32> to vector<8x128xf32>
    %137 = math.tanh %136 : vector<8x128xf32>
    %138 = vector.extract_strided_slice %119 {offsets = [0, 384], sizes = [8, 128], strides = [1, 1]} : vector<8x512xf32> to vector<8x128xf32>
    %cst_54 = arith.constant 5.000000e-01 : f32
    %139 = vector.broadcast %cst_54 : f32 to vector<8x128xf32>
    %140 = arith.mulf %139, %138 : vector<8x128xf32>
    %141 = math.tanh %140 : vector<8x128xf32>
    %cst_55 = arith.constant 5.000000e-01 : f32
    %142 = vector.broadcast %cst_55 : f32 to vector<8x128xf32>
    %143 = arith.mulf %142, %141 : vector<8x128xf32>
    %cst_56 = arith.constant 5.000000e-01 : f32
    %144 = vector.broadcast %cst_56 : f32 to vector<8x128xf32>
    %145 = arith.addf %143, %144 : vector<8x128xf32>
    %146 = arith.mulf %135, %113 : vector<8x128xf32>
    %147 = arith.mulf %127, %137 : vector<8x128xf32>
    %148 = arith.addf %146, %147 : vector<8x128xf32>
    %149 = math.tanh %148 : vector<8x128xf32>
    %150 = arith.mulf %145, %149 : vector<8x128xf32>
    %c32 = arith.constant 32 : index
    %c0_57 = arith.constant 0 : index
    %151 = vector.load %arg8[%c32, %c0_57] : memref<64x512xf32, #tpu.memory_space<vmem>>, vector<8x512xf32>
    %152 = arith.truncf %150 : vector<8x128xf32> to vector<8x128xbf16>
    %cst_58 = arith.constant dense<0.000000e+00> : vector<8x512xf32>
    %153 = tpu.matmul %152, %8, %cst_58 {dimension_numbers = #tpu.dot_dimension_numbers<[1], [0], [0], [1], [0, 0, 1, 1], [], []>} : vector<8x128xbf16>, vector<128x512xbf16>, vector<8x512xf32> -> vector<8x512xf32>
    %154 = arith.addf %151, %153 : vector<8x512xf32>
    %155 = vector.extract_strided_slice %154 {offsets = [0, 0], sizes = [8, 128], strides = [1, 1]} : vector<8x512xf32> to vector<8x128xf32>
    %cst_59 = arith.constant 5.000000e-01 : f32
    %156 = vector.broadcast %cst_59 : f32 to vector<8x128xf32>
    %157 = arith.mulf %156, %155 : vector<8x128xf32>
    %158 = math.tanh %157 : vector<8x128xf32>
    %cst_60 = arith.constant 5.000000e-01 : f32
    %159 = vector.broadcast %cst_60 : f32 to vector<8x128xf32>
    %160 = arith.mulf %159, %158 : vector<8x128xf32>
    %cst_61 = arith.constant 5.000000e-01 : f32
    %161 = vector.broadcast %cst_61 : f32 to vector<8x128xf32>
    %162 = arith.addf %160, %161 : vector<8x128xf32>
    %163 = vector.extract_strided_slice %154 {offsets = [0, 128], sizes = [8, 128], strides = [1, 1]} : vector<8x512xf32> to vector<8x128xf32>
    %cst_62 = arith.constant 5.000000e-01 : f32
    %164 = vector.broadcast %cst_62 : f32 to vector<8x128xf32>
    %165 = arith.mulf %164, %163 : vector<8x128xf32>
    %166 = math.tanh %165 : vector<8x128xf32>
    %cst_63 = arith.constant 5.000000e-01 : f32
    %167 = vector.broadcast %cst_63 : f32 to vector<8x128xf32>
    %168 = arith.mulf %167, %166 : vector<8x128xf32>
    %cst_64 = arith.constant 5.000000e-01 : f32
    %169 = vector.broadcast %cst_64 : f32 to vector<8x128xf32>
    %170 = arith.addf %168, %169 : vector<8x128xf32>
    %171 = vector.extract_strided_slice %154 {offsets = [0, 256], sizes = [8, 128], strides = [1, 1]} : vector<8x512xf32> to vector<8x128xf32>
    %172 = math.tanh %171 : vector<8x128xf32>
    %173 = vector.extract_strided_slice %154 {offsets = [0, 384], sizes = [8, 128], strides = [1, 1]} : vector<8x512xf32> to vector<8x128xf32>
    %cst_65 = arith.constant 5.000000e-01 : f32
    %174 = vector.broadcast %cst_65 : f32 to vector<8x128xf32>
    %175 = arith.mulf %174, %173 : vector<8x128xf32>
    %176 = math.tanh %175 : vector<8x128xf32>
    %cst_66 = arith.constant 5.000000e-01 : f32
    %177 = vector.broadcast %cst_66 : f32 to vector<8x128xf32>
    %178 = arith.mulf %177, %176 : vector<8x128xf32>
    %cst_67 = arith.constant 5.000000e-01 : f32
    %179 = vector.broadcast %cst_67 : f32 to vector<8x128xf32>
    %180 = arith.addf %178, %179 : vector<8x128xf32>
    %181 = arith.mulf %170, %148 : vector<8x128xf32>
    %182 = arith.mulf %162, %172 : vector<8x128xf32>
    %183 = arith.addf %181, %182 : vector<8x128xf32>
    %184 = math.tanh %183 : vector<8x128xf32>
    %185 = arith.mulf %180, %184 : vector<8x128xf32>
    %c40 = arith.constant 40 : index
    %c0_68 = arith.constant 0 : index
    %186 = vector.load %arg8[%c40, %c0_68] : memref<64x512xf32, #tpu.memory_space<vmem>>, vector<8x512xf32>
    %187 = arith.truncf %185 : vector<8x128xf32> to vector<8x128xbf16>
    %cst_69 = arith.constant dense<0.000000e+00> : vector<8x512xf32>
    %188 = tpu.matmul %187, %8, %cst_69 {dimension_numbers = #tpu.dot_dimension_numbers<[1], [0], [0], [1], [0, 0, 1, 1], [], []>} : vector<8x128xbf16>, vector<128x512xbf16>, vector<8x512xf32> -> vector<8x512xf32>
    %189 = arith.addf %186, %188 : vector<8x512xf32>
    %190 = vector.extract_strided_slice %189 {offsets = [0, 0], sizes = [8, 128], strides = [1, 1]} : vector<8x512xf32> to vector<8x128xf32>
    %cst_70 = arith.constant 5.000000e-01 : f32
    %191 = vector.broadcast %cst_70 : f32 to vector<8x128xf32>
    %192 = arith.mulf %191, %190 : vector<8x128xf32>
    %193 = math.tanh %192 : vector<8x128xf32>
    %cst_71 = arith.constant 5.000000e-01 : f32
    %194 = vector.broadcast %cst_71 : f32 to vector<8x128xf32>
    %195 = arith.mulf %194, %193 : vector<8x128xf32>
    %cst_72 = arith.constant 5.000000e-01 : f32
    %196 = vector.broadcast %cst_72 : f32 to vector<8x128xf32>
    %197 = arith.addf %195, %196 : vector<8x128xf32>
    %198 = vector.extract_strided_slice %189 {offsets = [0, 128], sizes = [8, 128], strides = [1, 1]} : vector<8x512xf32> to vector<8x128xf32>
    %cst_73 = arith.constant 5.000000e-01 : f32
    %199 = vector.broadcast %cst_73 : f32 to vector<8x128xf32>
    %200 = arith.mulf %199, %198 : vector<8x128xf32>
    %201 = math.tanh %200 : vector<8x128xf32>
    %cst_74 = arith.constant 5.000000e-01 : f32
    %202 = vector.broadcast %cst_74 : f32 to vector<8x128xf32>
    %203 = arith.mulf %202, %201 : vector<8x128xf32>
    %cst_75 = arith.constant 5.000000e-01 : f32
    %204 = vector.broadcast %cst_75 : f32 to vector<8x128xf32>
    %205 = arith.addf %203, %204 : vector<8x128xf32>
    %206 = vector.extract_strided_slice %189 {offsets = [0, 256], sizes = [8, 128], strides = [1, 1]} : vector<8x512xf32> to vector<8x128xf32>
    %207 = math.tanh %206 : vector<8x128xf32>
    %208 = vector.extract_strided_slice %189 {offsets = [0, 384], sizes = [8, 128], strides = [1, 1]} : vector<8x512xf32> to vector<8x128xf32>
    %cst_76 = arith.constant 5.000000e-01 : f32
    %209 = vector.broadcast %cst_76 : f32 to vector<8x128xf32>
    %210 = arith.mulf %209, %208 : vector<8x128xf32>
    %211 = math.tanh %210 : vector<8x128xf32>
    %cst_77 = arith.constant 5.000000e-01 : f32
    %212 = vector.broadcast %cst_77 : f32 to vector<8x128xf32>
    %213 = arith.mulf %212, %211 : vector<8x128xf32>
    %cst_78 = arith.constant 5.000000e-01 : f32
    %214 = vector.broadcast %cst_78 : f32 to vector<8x128xf32>
    %215 = arith.addf %213, %214 : vector<8x128xf32>
    %216 = arith.mulf %205, %183 : vector<8x128xf32>
    %217 = arith.mulf %197, %207 : vector<8x128xf32>
    %218 = arith.addf %216, %217 : vector<8x128xf32>
    %219 = math.tanh %218 : vector<8x128xf32>
    %220 = arith.mulf %215, %219 : vector<8x128xf32>
    %c48 = arith.constant 48 : index
    %c0_79 = arith.constant 0 : index
    %221 = vector.load %arg8[%c48, %c0_79] : memref<64x512xf32, #tpu.memory_space<vmem>>, vector<8x512xf32>
    %222 = arith.truncf %220 : vector<8x128xf32> to vector<8x128xbf16>
    %cst_80 = arith.constant dense<0.000000e+00> : vector<8x512xf32>
    %223 = tpu.matmul %222, %8, %cst_80 {dimension_numbers = #tpu.dot_dimension_numbers<[1], [0], [0], [1], [0, 0, 1, 1], [], []>} : vector<8x128xbf16>, vector<128x512xbf16>, vector<8x512xf32> -> vector<8x512xf32>
    %224 = arith.addf %221, %223 : vector<8x512xf32>
    %225 = vector.extract_strided_slice %224 {offsets = [0, 0], sizes = [8, 128], strides = [1, 1]} : vector<8x512xf32> to vector<8x128xf32>
    %cst_81 = arith.constant 5.000000e-01 : f32
    %226 = vector.broadcast %cst_81 : f32 to vector<8x128xf32>
    %227 = arith.mulf %226, %225 : vector<8x128xf32>
    %228 = math.tanh %227 : vector<8x128xf32>
    %cst_82 = arith.constant 5.000000e-01 : f32
    %229 = vector.broadcast %cst_82 : f32 to vector<8x128xf32>
    %230 = arith.mulf %229, %228 : vector<8x128xf32>
    %cst_83 = arith.constant 5.000000e-01 : f32
    %231 = vector.broadcast %cst_83 : f32 to vector<8x128xf32>
    %232 = arith.addf %230, %231 : vector<8x128xf32>
    %233 = vector.extract_strided_slice %224 {offsets = [0, 128], sizes = [8, 128], strides = [1, 1]} : vector<8x512xf32> to vector<8x128xf32>
    %cst_84 = arith.constant 5.000000e-01 : f32
    %234 = vector.broadcast %cst_84 : f32 to vector<8x128xf32>
    %235 = arith.mulf %234, %233 : vector<8x128xf32>
    %236 = math.tanh %235 : vector<8x128xf32>
    %cst_85 = arith.constant 5.000000e-01 : f32
    %237 = vector.broadcast %cst_85 : f32 to vector<8x128xf32>
    %238 = arith.mulf %237, %236 : vector<8x128xf32>
    %cst_86 = arith.constant 5.000000e-01 : f32
    %239 = vector.broadcast %cst_86 : f32 to vector<8x128xf32>
    %240 = arith.addf %238, %239 : vector<8x128xf32>
    %241 = vector.extract_strided_slice %224 {offsets = [0, 256], sizes = [8, 128], strides = [1, 1]} : vector<8x512xf32> to vector<8x128xf32>
    %242 = math.tanh %241 : vector<8x128xf32>
    %243 = vector.extract_strided_slice %224 {offsets = [0, 384], sizes = [8, 128], strides = [1, 1]} : vector<8x512xf32> to vector<8x128xf32>
    %cst_87 = arith.constant 5.000000e-01 : f32
    %244 = vector.broadcast %cst_87 : f32 to vector<8x128xf32>
    %245 = arith.mulf %244, %243 : vector<8x128xf32>
    %246 = math.tanh %245 : vector<8x128xf32>
    %cst_88 = arith.constant 5.000000e-01 : f32
    %247 = vector.broadcast %cst_88 : f32 to vector<8x128xf32>
    %248 = arith.mulf %247, %246 : vector<8x128xf32>
    %cst_89 = arith.constant 5.000000e-01 : f32
    %249 = vector.broadcast %cst_89 : f32 to vector<8x128xf32>
    %250 = arith.addf %248, %249 : vector<8x128xf32>
    %251 = arith.mulf %240, %218 : vector<8x128xf32>
    %252 = arith.mulf %232, %242 : vector<8x128xf32>
    %253 = arith.addf %251, %252 : vector<8x128xf32>
    %254 = math.tanh %253 : vector<8x128xf32>
    %255 = arith.mulf %250, %254 : vector<8x128xf32>
    %c56 = arith.constant 56 : index
    %c0_90 = arith.constant 0 : index
    %256 = vector.load %arg8[%c56, %c0_90] : memref<64x512xf32, #tpu.memory_space<vmem>>, vector<8x512xf32>
    %257 = arith.truncf %255 : vector<8x128xf32> to vector<8x128xbf16>
    %cst_91 = arith.constant dense<0.000000e+00> : vector<8x512xf32>
    %258 = tpu.matmul %257, %8, %cst_91 {dimension_numbers = #tpu.dot_dimension_numbers<[1], [0], [0], [1], [0, 0, 1, 1], [], []>} : vector<8x128xbf16>, vector<128x512xbf16>, vector<8x512xf32> -> vector<8x512xf32>
    %259 = arith.addf %256, %258 : vector<8x512xf32>
    %260 = vector.extract_strided_slice %259 {offsets = [0, 0], sizes = [8, 128], strides = [1, 1]} : vector<8x512xf32> to vector<8x128xf32>
    %cst_92 = arith.constant 5.000000e-01 : f32
    %261 = vector.broadcast %cst_92 : f32 to vector<8x128xf32>
    %262 = arith.mulf %261, %260 : vector<8x128xf32>
    %263 = math.tanh %262 : vector<8x128xf32>
    %cst_93 = arith.constant 5.000000e-01 : f32
    %264 = vector.broadcast %cst_93 : f32 to vector<8x128xf32>
    %265 = arith.mulf %264, %263 : vector<8x128xf32>
    %cst_94 = arith.constant 5.000000e-01 : f32
    %266 = vector.broadcast %cst_94 : f32 to vector<8x128xf32>
    %267 = arith.addf %265, %266 : vector<8x128xf32>
    %268 = vector.extract_strided_slice %259 {offsets = [0, 128], sizes = [8, 128], strides = [1, 1]} : vector<8x512xf32> to vector<8x128xf32>
    %cst_95 = arith.constant 5.000000e-01 : f32
    %269 = vector.broadcast %cst_95 : f32 to vector<8x128xf32>
    %270 = arith.mulf %269, %268 : vector<8x128xf32>
    %271 = math.tanh %270 : vector<8x128xf32>
    %cst_96 = arith.constant 5.000000e-01 : f32
    %272 = vector.broadcast %cst_96 : f32 to vector<8x128xf32>
    %273 = arith.mulf %272, %271 : vector<8x128xf32>
    %cst_97 = arith.constant 5.000000e-01 : f32
    %274 = vector.broadcast %cst_97 : f32 to vector<8x128xf32>
    %275 = arith.addf %273, %274 : vector<8x128xf32>
    %276 = vector.extract_strided_slice %259 {offsets = [0, 256], sizes = [8, 128], strides = [1, 1]} : vector<8x512xf32> to vector<8x128xf32>
    %277 = math.tanh %276 : vector<8x128xf32>
    %278 = vector.extract_strided_slice %259 {offsets = [0, 384], sizes = [8, 128], strides = [1, 1]} : vector<8x512xf32> to vector<8x128xf32>
    %cst_98 = arith.constant 5.000000e-01 : f32
    %279 = vector.broadcast %cst_98 : f32 to vector<8x128xf32>
    %280 = arith.mulf %279, %278 : vector<8x128xf32>
    %281 = math.tanh %280 : vector<8x128xf32>
    %cst_99 = arith.constant 5.000000e-01 : f32
    %282 = vector.broadcast %cst_99 : f32 to vector<8x128xf32>
    %283 = arith.mulf %282, %281 : vector<8x128xf32>
    %cst_100 = arith.constant 5.000000e-01 : f32
    %284 = vector.broadcast %cst_100 : f32 to vector<8x128xf32>
    %285 = arith.addf %283, %284 : vector<8x128xf32>
    %286 = arith.mulf %275, %253 : vector<8x128xf32>
    %287 = arith.mulf %267, %277 : vector<8x128xf32>
    %288 = arith.addf %286, %287 : vector<8x128xf32>
    %289 = math.tanh %288 : vector<8x128xf32>
    %290 = arith.mulf %285, %289 : vector<8x128xf32>
    %291 = arith.truncf %290 : vector<8x128xf32> to vector<8x128xbf16>
    %c0_101 = arith.constant 0 : index
    %c0_102 = arith.constant 0 : index
    %292 = vector.load %arg5[%c0_101, %c0_102] : memref<128x128xbf16, #tpu.memory_space<vmem>>, vector<128x128xbf16>
    %cst_103 = arith.constant dense<0.000000e+00> : vector<8x128xf32>
    %293 = tpu.matmul %291, %292, %cst_103 {dimension_numbers = #tpu.dot_dimension_numbers<[1], [0], [0], [1], [0, 0, 1, 1], [], []>} : vector<8x128xbf16>, vector<128x128xbf16>, vector<8x128xf32> -> vector<8x128xf32>
    %c0_104 = arith.constant 0 : index
    %c0_105 = arith.constant 0 : index
    %294 = vector.load %arg6[%c0_104, %c0_105] : memref<1x128xf32, #tpu.memory_space<vmem>>, vector<1x128xf32>
    %295 = vector.broadcast %294 : vector<1x128xf32> to vector<8x128xf32>
    %296 = arith.addf %293, %295 : vector<8x128xf32>
    %c0_106 = arith.constant 0 : index
    %c0_107 = arith.constant 0 : index
    %297 = vector.load %arg7[%c0_106, %c0_107] : memref<8x128xf32, #tpu.memory_space<vmem>>, vector<8x128xf32>
    tpu.vector_store %arg7[%c0_106, %c0_107], %296 {strides = array<i32>} : memref<8x128xf32, #tpu.memory_space<vmem>>, vector<8x128xf32>,
    return
  }
  func.func @transform_0(%arg0: i32) -> (i32, i32, i32) {
    %c0_i32 = arith.constant 0 : i32
    %c0_i32_0 = arith.constant 0 : i32
    %c0_i32_1 = arith.constant 0 : i32
    return %c0_i32, %arg0, %c0_i32_0 : i32, i32, i32
  }
  func.func @transform_1(%arg0: i32) -> (i32, i32) {
    %c0_i32 = arith.constant 0 : i32
    %c0_i32_0 = arith.constant 0 : i32
    %c0_i32_1 = arith.constant 0 : i32
    return %c0_i32, %c0_i32_0 : i32, i32
  }
  func.func @transform_2(%arg0: i32) -> (i32, i32) {
    %c0_i32 = arith.constant 0 : i32
    %c0_i32_0 = arith.constant 0 : i32
    %c0_i32_1 = arith.constant 0 : i32
    return %c0_i32, %c0_i32_0 : i32, i32
  }
  func.func @transform_3(%arg0: i32) -> (i32, i32) {
    %c0_i32 = arith.constant 0 : i32
    %c0_i32_0 = arith.constant 0 : i32
    %c0_i32_1 = arith.constant 0 : i32
    return %c0_i32, %c0_i32_0 : i32, i32
  }
  func.func @transform_4(%arg0: i32) -> (i32, i32) {
    %c0_i32 = arith.constant 0 : i32
    %c0_i32_0 = arith.constant 0 : i32
    %c0_i32_1 = arith.constant 0 : i32
    return %c0_i32, %c0_i32_0 : i32, i32
  }
  func.func @transform_5(%arg0: i32) -> (i32, i32) {
    %c0_i32 = arith.constant 0 : i32
    %c0_i32_0 = arith.constant 0 : i32
    %c0_i32_1 = arith.constant 0 : i32
    return %c0_i32, %c0_i32_0 : i32, i32
  }
  func.func @transform_6(%arg0: i32) -> (i32, i32) {
    %c0_i32 = arith.constant 0 : i32
    %c0_i32_0 = arith.constant 0 : i32
    return %arg0, %c0_i32 : i32, i32
  }
}

</mosaic_0001>

<llo_original>
// kernel: prediction_model_forward.1
$region0: #{prediction_model_forward.1}
  #allocation0 [shape = 'u32[]', space=smem, size = 0x4, offset = 0x4, fixed_abs, tag = 'smem constant byte address 0x4 - core index']
  #allocation1 [shape = 'u32[144,128]{1,0:T(1,128)}', space=vmem, size = 0x12000, scoped, tag = 'internal scratch']
  #allocation2 [shape = 'f32[64,512]{1,0:T(8,128)}', space=vmem, size = 0x20000, scoped, tag = 'scratch operand']
  %s0 = inlined_call_operand.vmem [shape: bf16[8,8,8], index: 0, kind: input, shape index: {}]
  %s1 = inlined_call_operand.vmem [shape: bf16[8,512], index: 1, kind: input, shape index: {}]
  %s2 = inlined_call_operand.hbm [shape: bf16[128,512], index: 2, kind: input, shape index: {}]
  %s3 = inlined_call_operand.vmem [shape: f32[1,512], index: 3, kind: input, shape index: {}]
  %s4 = inlined_call_operand.vmem [shape: bf16[128,128], index: 4, kind: input, shape index: {}]
  %s5 = inlined_call_operand.vmem [shape: f32[1,128], index: 5, kind: input, shape index: {}]
  %s6 = inlined_call_operand.vmem [shape: f32[8,128], index: 6, kind: output, shape index: {}]
  %s7 = sld [smem:[#allocation0]]
  $region38: #{prediction_model_forward.1} parent=0
    _
  %s9 = ssub.s32 1, %s7
  %s10 = scalar_select 0, %s9, %s7
  $region1: #{prediction_model_forward.1} parent=0
    #allocation3 [shape = 'u8[131072]{0}', space=vmem, size = 0x20000, scoped, tag = 'input window, operand 2, single buffered']
    #allocation4 [shape = 's32[1]{0}', space=sflag, size = 0x4, scoped, tag = 'scoped memory for prediction_model_forward.1']
    %11 = vsyncpa [#allocation4], 0
    // Predicated region
    $region2: #{prediction_model_forward.1} parent=1 // pred_check
      _
    $region3: #{prediction_model_forward.1} parent=1 // pred_check_branch
      %13 = sbr.rel (0) target = $region5
    $region4: #{prediction_model_forward.1} parent=1 // pred_region
      _
    $region5: #{prediction_model_forward.1} parent=1 // pred_fallthru
      _
    // Predicated region
    $region6: #{prediction_model_forward.1} parent=1 // pred_check
      _
    $region7: #{prediction_model_forward.1} parent=1 // pred_check_branch
      %15 = sbr.rel (0) target = $region9
    $region8: #{prediction_model_forward.1} parent=1 // pred_region
      _
    $region9: #{prediction_model_forward.1} parent=1 // pred_fallthru
      _
    // Predicated region
    $region10: #{prediction_model_forward.1} parent=1 // pred_check
      _
    $region11: #{prediction_model_forward.1} parent=1 // pred_check_branch
      %17 = sbr.rel (0) target = $region13
    $region12: #{prediction_model_forward.1} parent=1 // pred_region
      %s19 = ssub.s32 4096, 4096
      %20 = vsyncadd [#allocation4], %s19
      %s21 = sshll.u32 [#allocation3], 4
      %s22 = int_to_ptr.vmem [resolvable:$true] %s21
      %27 = dma.hbm_to_vmem [thread:$0]  %s2, 4096, %s22, [#allocation4], 256, 256, 16
    $region13: #{prediction_model_forward.1} parent=1 // pred_fallthru
      _
    // Predicated region
    $region14: #{prediction_model_forward.1} parent=1 // pred_check
      _
    $region15: #{prediction_model_forward.1} parent=1 // pred_check_branch
      %29 = sbr.rel (0) target = $region17
    $region16: #{prediction_model_forward.1} parent=1 // pred_region
      _
    $region17: #{prediction_model_forward.1} parent=1 // pred_fallthru
      _
    // Predicated region
    $region18: #{prediction_model_forward.1} parent=1 // pred_check
      _
    $region19: #{prediction_model_forward.1} parent=1 // pred_check_branch
      %31 = sbr.rel (0) target = $region21
    $region20: #{prediction_model_forward.1} parent=1 // pred_region
      _
    $region21: #{prediction_model_forward.1} parent=1 // pred_fallthru
      _
    // Predicated region
    $region22: #{prediction_model_forward.1} parent=1 // pred_check
      _
    $region23: #{prediction_model_forward.1} parent=1 // pred_check_branch
      %33 = sbr.rel (0) target = $region25
    $region24: #{prediction_model_forward.1} parent=1 // pred_region
      _
    $region25: #{prediction_model_forward.1} parent=1 // pred_fallthru
      _
    // Predicated region
    $region26: #{prediction_model_forward.1} parent=1 // pred_check
      _
    $region27: #{prediction_model_forward.1} parent=1 // pred_check_branch
      %35 = sbr.rel (0) target = $region29
    $region28: #{prediction_model_forward.1} parent=1 // pred_region
      %36 = dma.done [#allocation4], 4096
    $region29: #{prediction_model_forward.1} parent=1 // pred_fallthru
      _
    %v38 = vld [vmem:[%s0] sm:$0xf]
    %v39 = vld [vmem:[%s0 + $0x4] sm:$0xf]
    %v40 = vld [vmem:[%s0 + $0x8] sm:$0xf]
    %v41 = vld [vmem:[%s0 + $0xc] sm:$0xf]
    %v42 = vld [vmem:[%s0 + $0x10] sm:$0xf]
    %v43 = vld [vmem:[%s0 + $0x14] sm:$0xf]
    %v44 = vld [vmem:[%s0 + $0x18] sm:$0xf]
    %v45 = vld [vmem:[%s0 + $0x1c] sm:$0xf]
    %v46 = vld [vmem:[%s1] sm:$0xff]
    %v47 = vld [vmem:[%s1 + $0x8] sm:$0xff]
    %v48 = vld [vmem:[%s3] sm:$0xf]
    %v50 = vlaneseq
    %v51 = vshrl.u32 %v50, 7
    %v52 = vsub.s32 0, %v51
    %v53 = vrot.slane %v48, %v52
    %v54 = vlaneseq
    %v55 = vshrl.u32 %v54, 7
    %v56 = vsub.s32 1, %v55
    %v57 = vrot.slane %v48, %v56
    %v58 = vlaneseq
    %v59 = vshrl.u32 %v58, 7
    %v60 = vsub.s32 2, %v59
    %v61 = vrot.slane %v48, %v60
    %v62 = vlaneseq
    %v63 = vshrl.u32 %v62, 7
    %v64 = vsub.s32 3, %v63
    %v65 = vrot.slane %v48, %v64
    %v78 = vunpack.c.l.b16 %v38
    %v79 = vunpack.c.l.b16 %v39
    %v80 = vunpack.c.l.b16 %v40
    %v81 = vunpack.c.l.b16 %v41
    %v82 = vunpack.c.l.b16 %v42
    %v83 = vunpack.c.l.b16 %v43
    %v84 = vunpack.c.l.b16 %v44
    %v85 = vunpack.c.l.b16 %v45
    %v86 = vpack.c.b16 %v79, %v78
    %v87 = vpack.c.b16 %v81, %v80
    %v88 = vpack.c.b16 %v83, %v82
    %v89 = vpack.c.b16 %v85, %v84
    %v92 = vunpack.c.l.b16 %v46
    %v93 = vunpack.c.h.b16 %v46
    %v94 = vunpack.c.l.b16 %v47
    %v95 = vunpack.c.h.b16 %v47
    %v96 = vpack.c.b16 %v92, %v92
    %v97 = vpack.c.b16 %v93, %v93
    %v98 = vpack.c.b16 %v94, %v94
    %v99 = vpack.c.b16 %v95, %v95
    %vm100 = vcmask 64512
    %v102 = vsel %vm100, %v86, 0
    %v105 = vsel %vm100, %v87, 0
    %v108 = vsel %vm100, %v88, 0
    %v111 = vsel %vm100, %v89, 0
    %vm113 = vcmask 1043456
    %v115 = vsel %vm113, %v96, 0
    %v118 = vsel %vm113, %v97, 0
    %v121 = vsel %vm113, %v98, 0
    %v124 = vsel %vm113, %v99, 0
    %126 = vmatprep.subr.bf16.mxu0 %v118
    %127 = vmatpush1.bf16.msra.mxu0 %v115
    %128 = vmatprep.subr.bf16.mxu0 0
    %129 = vmatpush1.bf16.msra.mxu0 0
    %130 = vmatprep.subr.bf16.mxu0 0
    %131 = vmatpush1.bf16.msra.mxu0 0
    %132 = vmatprep.subr.bf16.mxu0 0
    %133 = vmatpush1.bf16.msra.mxu0 0
    %134 = vmatprep.subr.bf16.mxu0 0
    %135 = vmatpush1.bf16.msra.mxu0 0
    %136 = vmatprep.subr.bf16.mxu0 0
    %137 = vmatpush1.bf16.msra.mxu0 0
    %138 = vmatprep.subr.bf16.mxu0 0
    %139 = vmatpush1.bf16.msra.mxu0 0
    %140 = vmatprep.subr.bf16.mxu0 0
    %141 = vmatpush1.bf16.msra.mxu0 0
    %142 = vmatprep.subr.bf16.mxu0 0
    %143 = vmatpush1.bf16.msra.mxu0 0
    %144 = vmatprep.subr.bf16.mxu0 0
    %145 = vmatpush1.bf16.msra.mxu0 0
    %146 = vmatprep.subr.bf16.mxu0 0
    %147 = vmatpush1.bf16.msra.mxu0 0
    %148 = vmatprep.subr.bf16.mxu0 0
    %149 = vmatpush1.bf16.msra.mxu0 0
    %150 = vmatprep.subr.bf16.mxu0 0
    %151 = vmatpush1.bf16.msra.mxu0 0
    %152 = vmatprep.subr.bf16.mxu0 0
    %153 = vmatpush1.bf16.msra.mxu0 0
    %154 = vmatprep.subr.bf16.mxu0 0
    %155 = vmatpush1.bf16.msra.mxu0 0
    %156 = vmatprep.subr.bf16.mxu0 0
    %157 = vmatpush1.bf16.msra.mxu0 0
    %158 = vmatprep.mubr.bf16.mxu0 0
    %159 = vmatmul.mubr.bf16.gmra.mrb[0].mxu0 %v102
    %v160 = vpop.f32.mrb[0].mxu0
    %v161 = vadd.f32 %v53, %v160
    %v162 = vpop.f32.mrb[0].mxu0
    %v163 = vadd.f32 %v57, %v162
    %v164 = vpop.f32.mrb[0].mxu0
    %v165 = vadd.f32 %v53, %v164
    %v166 = vpop.f32.mrb[0].mxu0
    %v167 = vadd.f32 %v57, %v166
    %168 = vmatprep.mubr.bf16.mxu0 0
    %169 = vmatmul.mubr.bf16.gmra.mrb[0].mxu0 %v105
    %v170 = vpop.f32.mrb[0].mxu0
    %v171 = vadd.f32 %v53, %v170
    %v172 = vpop.f32.mrb[0].mxu0
    %v173 = vadd.f32 %v57, %v172
    %v174 = vpop.f32.mrb[0].mxu0
    %v175 = vadd.f32 %v53, %v174
    %v176 = vpop.f32.mrb[0].mxu0
    %v177 = vadd.f32 %v57, %v176
    %178 = vmatprep.mubr.bf16.mxu0 0
    %179 = vmatmul.mubr.bf16.gmra.mrb[0].mxu0 %v108
    %v180 = vpop.f32.mrb[0].mxu0
    %v181 = vadd.f32 %v53, %v180
    %v182 = vpop.f32.mrb[0].mxu0
    %v183 = vadd.f32 %v57, %v182
    %v184 = vpop.f32.mrb[0].mxu0
    %v185 = vadd.f32 %v53, %v184
    %v186 = vpop.f32.mrb[0].mxu0
    %v187 = vadd.f32 %v57, %v186
    %188 = vmatprep.mubr.bf16.mxu0 0
    %189 = vmatmul.mubr.bf16.gmra.mrb[0].mxu0 %v111
    %v190 = vpop.f32.mrb[0].mxu0
    %v191 = vadd.f32 %v53, %v190
    %v192 = vpop.f32.mrb[0].mxu0
    %v193 = vadd.f32 %v57, %v192
    %v194 = vpop.f32.mrb[0].mxu0
    %v195 = vadd.f32 %v53, %v194
    %v196 = vpop.f32.mrb[0].mxu0
    %v197 = vadd.f32 %v57, %v196
    %198 = vdwg.mxu0
    %199 = vmatprep.subr.bf16.mxu0 %v124
    %200 = vmatpush1.bf16.msra.mxu0 %v121
    %201 = vmatprep.subr.bf16.mxu0 0
    %202 = vmatpush1.bf16.msra.mxu0 0
    %203 = vmatprep.subr.bf16.mxu0 0
    %204 = vmatpush1.bf16.msra.mxu0 0
    %205 = vmatprep.subr.bf16.mxu0 0
    %206 = vmatpush1.bf16.msra.mxu0 0
    %207 = vmatprep.subr.bf16.mxu0 0
    %208 = vmatpush1.bf16.msra.mxu0 0
    %209 = vmatprep.subr.bf16.mxu0 0
    %210 = vmatpush1.bf16.msra.mxu0 0
    %211 = vmatprep.subr.bf16.mxu0 0
    %212 = vmatpush1.bf16.msra.mxu0 0
    %213 = vmatprep.subr.bf16.mxu0 0
    %214 = vmatpush1.bf16.msra.mxu0 0
    %215 = vmatprep.subr.bf16.mxu0 0
    %216 = vmatpush1.bf16.msra.mxu0 0
    %217 = vmatprep.subr.bf16.mxu0 0
    %218 = vmatpush1.bf16.msra.mxu0 0
    %219 = vmatprep.subr.bf16.mxu0 0
    %220 = vmatpush1.bf16.msra.mxu0 0
    %221 = vmatprep.subr.bf16.mxu0 0
    %222 = vmatpush1.bf16.msra.mxu0 0
    %223 = vmatprep.subr.bf16.mxu0 0
    %224 = vmatpush1.bf16.msra.mxu0 0
    %225 = vmatprep.subr.bf16.mxu0 0
    %226 = vmatpush1.bf16.msra.mxu0 0
    %227 = vmatprep.subr.bf16.mxu0 0
    %228 = vmatpush1.bf16.msra.mxu0 0
    %229 = vmatprep.subr.bf16.mxu0 0
    %230 = vmatpush1.bf16.msra.mxu0 0
    %231 = vmatprep.mubr.bf16.mxu0 0
    %232 = vmatmul.mubr.bf16.gmra.mrb[0].mxu0 %v102
    %v233 = vpop.f32.mrb[0].mxu0
    %v234 = vadd.f32 %v61, %v233
    %v235 = vpop.f32.mrb[0].mxu0
    %v236 = vadd.f32 %v65, %v235
    %v237 = vpop.f32.mrb[0].mxu0
    %v238 = vadd.f32 %v61, %v237
    %v239 = vpop.f32.mrb[0].mxu0
    %v240 = vadd.f32 %v65, %v239
    %241 = vmatprep.mubr.bf16.mxu0 0
    %242 = vmatmul.mubr.bf16.gmra.mrb[0].mxu0 %v105
    %v243 = vpop.f32.mrb[0].mxu0
    %v244 = vadd.f32 %v61, %v243
    %v245 = vpop.f32.mrb[0].mxu0
    %v246 = vadd.f32 %v65, %v245
    %v247 = vpop.f32.mrb[0].mxu0
    %v248 = vadd.f32 %v61, %v247
    %v249 = vpop.f32.mrb[0].mxu0
    %v250 = vadd.f32 %v65, %v249
    %251 = vmatprep.mubr.bf16.mxu0 0
    %252 = vmatmul.mubr.bf16.gmra.mrb[0].mxu0 %v108
    %v253 = vpop.f32.mrb[0].mxu0
    %v254 = vadd.f32 %v61, %v253
    %v255 = vpop.f32.mrb[0].mxu0
    %v256 = vadd.f32 %v65, %v255
    %v257 = vpop.f32.mrb[0].mxu0
    %v258 = vadd.f32 %v61, %v257
    %v259 = vpop.f32.mrb[0].mxu0
    %v260 = vadd.f32 %v65, %v259
    %261 = vmatprep.mubr.bf16.mxu0 0
    %262 = vmatmul.mubr.bf16.gmra.mrb[0].mxu0 %v111
    %v263 = vpop.f32.mrb[0].mxu0
    %v264 = vadd.f32 %v61, %v263
    %v265 = vpop.f32.mrb[0].mxu0
    %v266 = vadd.f32 %v65, %v265
    %v267 = vpop.f32.mrb[0].mxu0
    %v268 = vadd.f32 %v61, %v267
    %v269 = vpop.f32.mrb[0].mxu0
    %v270 = vadd.f32 %v65, %v269
    %271 = vdwg.mxu0
    %272 = vst [vmem:[#allocation2] sm:$0xff] %v161
    %273 = vst [vmem:[#allocation2 + $0x8] sm:$0xff] %v163
    %274 = vst [vmem:[#allocation2 + $0x10] sm:$0xff] %v234
    %275 = vst [vmem:[#allocation2 + $0x18] sm:$0xff] %v236
    %276 = vst [vmem:[#allocation2 + $0x20] sm:$0xff] %v165
    %277 = vst [vmem:[#allocation2 + $0x28] sm:$0xff] %v167
    %278 = vst [vmem:[#allocation2 + $0x30] sm:$0xff] %v238
    %279 = vst [vmem:[#allocation2 + $0x38] sm:$0xff] %v240
    %280 = vst [vmem:[#allocation2 + $0x40] sm:$0xff] %v171
    %281 = vst [vmem:[#allocation2 + $0x48] sm:$0xff] %v173
    %282 = vst [vmem:[#allocation2 + $0x50] sm:$0xff] %v244
    %283 = vst [vmem:[#allocation2 + $0x58] sm:$0xff] %v246
    %284 = vst [vmem:[#allocation2 + $0x60] sm:$0xff] %v175
    %285 = vst [vmem:[#allocation2 + $0x68] sm:$0xff] %v177
    %286 = vst [vmem:[#allocation2 + $0x70] sm:$0xff] %v248
    %287 = vst [vmem:[#allocation2 + $0x78] sm:$0xff] %v250
    %288 = vst [vmem:[#allocation2 + $0x80] sm:$0xff] %v181
    %289 = vst [vmem:[#allocation2 + $0x88] sm:$0xff] %v183
    %290 = vst [vmem:[#allocation2 + $0x90] sm:$0xff] %v254
    %291 = vst [vmem:[#allocation2 + $0x98] sm:$0xff] %v256
    %292 = vst [vmem:[#allocation2 + $0xa0] sm:$0xff] %v185
    %293 = vst [vmem:[#allocation2 + $0xa8] sm:$0xff] %v187
    %294 = vst [vmem:[#allocation2 + $0xb0] sm:$0xff] %v258
    %295 = vst [vmem:[#allocation2 + $0xb8] sm:$0xff] %v260
    %296 = vst [vmem:[#allocation2 + $0xc0] sm:$0xff] %v191
    %297 = vst [vmem:[#allocation2 + $0xc8] sm:$0xff] %v193
    %298 = vst [vmem:[#allocation2 + $0xd0] sm:$0xff] %v264
    %299 = vst [vmem:[#allocation2 + $0xd8] sm:$0xff] %v266
    %300 = vst [vmem:[#allocation2 + $0xe0] sm:$0xff] %v195
    %301 = vst [vmem:[#allocation2 + $0xe8] sm:$0xff] %v197
    %302 = vst [vmem:[#allocation2 + $0xf0] sm:$0xff] %v268
    %303 = vst [vmem:[#allocation2 + $0xf8] sm:$0xff] %v270
    %v304 = vld [vmem:[#allocation3] sm:$0xff]
    %v305 = vld [vmem:[#allocation3 + $0x8] sm:$0xff]
    %v306 = vld [vmem:[#allocation3 + $0x10] sm:$0xff]
    %v307 = vld [vmem:[#allocation3 + $0x18] sm:$0xff]
    %v308 = vld [vmem:[#allocation3 + $0x20] sm:$0xff]
    %v309 = vld [vmem:[#allocation3 + $0x28] sm:$0xff]
    %v310 = vld [vmem:[#allocation3 + $0x30] sm:$0xff]
    %v311 = vld [vmem:[#allocation3 + $0x38] sm:$0xff]
    %v312 = vld [vmem:[#allocation3 + $0x40] sm:$0xff]
    %v313 = vld [vmem:[#allocation3 + $0x48] sm:$0xff]
    %v314 = vld [vmem:[#allocation3 + $0x50] sm:$0xff]
    %v315 = vld [vmem:[#allocation3 + $0x58] sm:$0xff]
    %v316 = vld [vmem:[#allocation3 + $0x60] sm:$0xff]
    %v317 = vld [vmem:[#allocation3 + $0x68] sm:$0xff]
    %v318 = vld [vmem:[#allocation3 + $0x70] sm:$0xff]
    %v319 = vld [vmem:[#allocation3 + $0x78] sm:$0xff]
    %v320 = vld [vmem:[#allocation3 + $0x80] sm:$0xff]
    %v321 = vld [vmem:[#allocation3 + $0x88] sm:$0xff]
    %v322 = vld [vmem:[#allocation3 + $0x90] sm:$0xff]
    %v323 = vld [vmem:[#allocation3 + $0x98] sm:$0xff]
    %v324 = vld [vmem:[#allocation3 + $0xa0] sm:$0xff]
    %v325 = vld [vmem:[#allocation3 + $0xa8] sm:$0xff]
    %v326 = vld [vmem:[#allocation3 + $0xb0] sm:$0xff]
    %v327 = vld [vmem:[#allocation3 + $0xb8] sm:$0xff]
    %v328 = vld [vmem:[#allocation3 + $0xc0] sm:$0xff]
    %v329 = vld [vmem:[#allocation3 + $0xc8] sm:$0xff]
    %v330 = vld [vmem:[#allocation3 + $0xd0] sm:$0xff]
    %v331 = vld [vmem:[#allocation3 + $0xd8] sm:$0xff]
    %v332 = vld [vmem:[#allocation3 + $0xe0] sm:$0xff]
    %v333 = vld [vmem:[#allocation3 + $0xe8] sm:$0xff]
    %v334 = vld [vmem:[#allocation3 + $0xf0] sm:$0xff]
    %v335 = vld [vmem:[#allocation3 + $0xf8] sm:$0xff]
    %v336 = vld [vmem:[#allocation2] sm:$0xff]
    %v337 = vld [vmem:[#allocation2 + $0x8] sm:$0xff]
    %v338 = vld [vmem:[#allocation2 + $0x10] sm:$0xff]
    %v339 = vld [vmem:[#allocation2 + $0x18] sm:$0xff]
    %v372 = vunpack.c.l.b16 %v304
    %v373 = vunpack.c.h.b16 %v304
    %v374 = vunpack.c.l.b16 %v305
    %v375 = vunpack.c.h.b16 %v305
    %v376 = vunpack.c.l.b16 %v306
    %v377 = vunpack.c.h.b16 %v306
    %v378 = vunpack.c.l.b16 %v307
    %v379 = vunpack.c.h.b16 %v307
    %v380 = vunpack.c.l.b16 %v308
    %v381 = vunpack.c.h.b16 %v308
    %v382 = vunpack.c.l.b16 %v309
    %v383 = vunpack.c.h.b16 %v309
    %v384 = vunpack.c.l.b16 %v310
    %v385 = vunpack.c.h.b16 %v310
    %v386 = vunpack.c.l.b16 %v311
    %v387 = vunpack.c.h.b16 %v311
    %v388 = vunpack.c.l.b16 %v312
    %v389 = vunpack.c.h.b16 %v312
    %v390 = vunpack.c.l.b16 %v313
    %v391 = vunpack.c.h.b16 %v313
    %v392 = vunpack.c.l.b16 %v314
    %v393 = vunpack.c.h.b16 %v314
    %v394 = vunpack.c.l.b16 %v315
    %v395 = vunpack.c.h.b16 %v315
    %v396 = vunpack.c.l.b16 %v316
    %v397 = vunpack.c.h.b16 %v316
    %v398 = vunpack.c.l.b16 %v317
    %v399 = vunpack.c.h.b16 %v317
    %v400 = vunpack.c.l.b16 %v318
    %v401 = vunpack.c.h.b16 %v318
    %v402 = vunpack.c.l.b16 %v319
    %v403 = vunpack.c.h.b16 %v319
    %v404 = vunpack.c.l.b16 %v320
    %v405 = vunpack.c.h.b16 %v320
    %v406 = vunpack.c.l.b16 %v321
    %v407 = vunpack.c.h.b16 %v321
    %v408 = vunpack.c.l.b16 %v322
    %v409 = vunpack.c.h.b16 %v322
    %v410 = vunpack.c.l.b16 %v323
    %v411 = vunpack.c.h.b16 %v323
    %v412 = vunpack.c.l.b16 %v324
    %v413 = vunpack.c.h.b16 %v324
    %v414 = vunpack.c.l.b16 %v325
    %v415 = vunpack.c.h.b16 %v325
    %v416 = vunpack.c.l.b16 %v326
    %v417 = vunpack.c.h.b16 %v326
    %v418 = vunpack.c.l.b16 %v327
    %v419 = vunpack.c.h.b16 %v327
    %v420 = vunpack.c.l.b16 %v328
    %v421 = vunpack.c.h.b16 %v328
    %v422 = vunpack.c.l.b16 %v329
    %v423 = vunpack.c.h.b16 %v329
    %v424 = vunpack.c.l.b16 %v330
    %v425 = vunpack.c.h.b16 %v330
    %v426 = vunpack.c.l.b16 %v331
    %v427 = vunpack.c.h.b16 %v331
    %v428 = vunpack.c.l.b16 %v332
    %v429 = vunpack.c.h.b16 %v332
    %v430 = vunpack.c.l.b16 %v333
    %v431 = vunpack.c.h.b16 %v333
    %v432 = vunpack.c.l.b16 %v334
    %v433 = vunpack.c.h.b16 %v334
    %v434 = vunpack.c.l.b16 %v335
    %v435 = vunpack.c.h.b16 %v335
    %v436 = vpack.c.b16 %v376, %v372
    %v437 = vpack.c.b16 %v377, %v373
    %v438 = vpack.c.b16 %v378, %v374
    %v439 = vpack.c.b16 %v379, %v375
    %v440 = vpack.c.b16 %v384, %v380
    %v441 = vpack.c.b16 %v385, %v381
    %v442 = vpack.c.b16 %v386, %v382
    %v443 = vpack.c.b16 %v387, %v383
    %v444 = vpack.c.b16 %v392, %v388
    %v445 = vpack.c.b16 %v393, %v389
    %v446 = vpack.c.b16 %v394, %v390
    %v447 = vpack.c.b16 %v395, %v391
    %v448 = vpack.c.b16 %v400, %v396
    %v449 = vpack.c.b16 %v401, %v397
    %v450 = vpack.c.b16 %v402, %v398
    %v451 = vpack.c.b16 %v403, %v399
    %v452 = vpack.c.b16 %v408, %v404
    %v453 = vpack.c.b16 %v409, %v405
    %v454 = vpack.c.b16 %v410, %v406
    %v455 = vpack.c.b16 %v411, %v407
    %v456 = vpack.c.b16 %v416, %v412
    %v457 = vpack.c.b16 %v417, %v413
    %v458 = vpack.c.b16 %v418, %v414
    %v459 = vpack.c.b16 %v419, %v415
    %v460 = vpack.c.b16 %v424, %v420
    %v461 = vpack.c.b16 %v425, %v421
    %v462 = vpack.c.b16 %v426, %v422
    %v463 = vpack.c.b16 %v427, %v423
    %v464 = vpack.c.b16 %v432, %v428
    %v465 = vpack.c.b16 %v433, %v429
    %v466 = vpack.c.b16 %v434, %v430
    %v467 = vpack.c.b16 %v435, %v431
    %500 = vmatprep.subr.bf16.mxu0 %v437
    %501 = vmatpush1.bf16.msra.mxu0 %v436
    %502 = vmatprep.subr.bf16.mxu0 %v441
    %503 = vmatpush1.bf16.msra.mxu0 %v440
    %504 = vmatprep.subr.bf16.mxu0 %v445
    %505 = vmatpush1.bf16.msra.mxu0 %v444
    %506 = vmatprep.subr.bf16.mxu0 %v449
    %507 = vmatpush1.bf16.msra.mxu0 %v448
    %508 = vmatprep.subr.bf16.mxu0 %v453
    %509 = vmatpush1.bf16.msra.mxu0 %v452
    %510 = vmatprep.subr.bf16.mxu0 %v457
    %511 = vmatpush1.bf16.msra.mxu0 %v456
    %512 = vmatprep.subr.bf16.mxu0 %v461
    %513 = vmatpush1.bf16.msra.mxu0 %v460
    %514 = vmatprep.subr.bf16.mxu0 %v465
    %515 = vmatpush1.bf16.msra.mxu0 %v464
    %516 = vmatprep.subr.bf16.mxu0 0
    %517 = vmatpush1.bf16.msra.mxu0 0
    %518 = vmatprep.subr.bf16.mxu0 0
    %519 = vmatpush1.bf16.msra.mxu0 0
    %520 = vmatprep.subr.bf16.mxu0 0
    %521 = vmatpush1.bf16.msra.mxu0 0
    %522 = vmatprep.subr.bf16.mxu0 0
    %523 = vmatpush1.bf16.msra.mxu0 0
    %524 = vmatprep.subr.bf16.mxu0 0
    %525 = vmatpush1.bf16.msra.mxu0 0
    %526 = vmatprep.subr.bf16.mxu0 0
    %527 = vmatpush1.bf16.msra.mxu0 0
    %528 = vmatprep.subr.bf16.mxu0 0
    %529 = vmatpush1.bf16.msra.mxu0 0
    %530 = vmatprep.subr.bf16.mxu0 0
    %531 = vmatpush1.bf16.msra.mxu0 0
    %532 = vmatprep.mubr.bf16.mxu0 0
    %533 = vmatmul.mubr.bf16.gmra.mrb[0].mxu0 0
    %v534 = vpop.f32.mrb[0].mxu0
    %v535 = vadd.f32 0.0, %v534
    %v536 = vpop.f32.mrb[0].mxu0
    %v537 = vadd.f32 0.0, %v536
    %v538 = vpop.f32.mrb[0].mxu0
    %v539 = vpop.f32.mrb[0].mxu0
    %540 = vdwg.mxu0
    %541 = vmatprep.subr.bf16.mxu0 %v439
    %542 = vmatpush1.bf16.msra.mxu0 %v438
    %543 = vmatprep.subr.bf16.mxu0 %v443
    %544 = vmatpush1.bf16.msra.mxu0 %v442
    %545 = vmatprep.subr.bf16.mxu0 %v447
    %546 = vmatpush1.bf16.msra.mxu0 %v446
    %547 = vmatprep.subr.bf16.mxu0 %v451
    %548 = vmatpush1.bf16.msra.mxu0 %v450
    %549 = vmatprep.subr.bf16.mxu0 %v455
    %550 = vmatpush1.bf16.msra.mxu0 %v454
    %551 = vmatprep.subr.bf16.mxu0 %v459
    %552 = vmatpush1.bf16.msra.mxu0 %v458
    %553 = vmatprep.subr.bf16.mxu0 %v463
    %554 = vmatpush1.bf16.msra.mxu0 %v462
    %555 = vmatprep.subr.bf16.mxu0 %v467
    %556 = vmatpush1.bf16.msra.mxu0 %v466
    %557 = vmatprep.subr.bf16.mxu0 0
    %558 = vmatpush1.bf16.msra.mxu0 0
    %559 = vmatprep.subr.bf16.mxu0 0
    %560 = vmatpush1.bf16.msra.mxu0 0
    %561 = vmatprep.subr.bf16.mxu0 0
    %562 = vmatpush1.bf16.msra.mxu0 0
    %563 = vmatprep.subr.bf16.mxu0 0
    %564 = vmatpush1.bf16.msra.mxu0 0
    %565 = vmatprep.subr.bf16.mxu0 0
    %566 = vmatpush1.bf16.msra.mxu0 0
    %567 = vmatprep.subr.bf16.mxu0 0
    %568 = vmatpush1.bf16.msra.mxu0 0
    %569 = vmatprep.subr.bf16.mxu0 0
    %570 = vmatpush1.bf16.msra.mxu0 0
    %571 = vmatprep.subr.bf16.mxu0 0
    %572 = vmatpush1.bf16.msra.mxu0 0
    %573 = vmatprep.mubr.bf16.mxu0 0
    %574 = vmatmul.mubr.bf16.gmra.mrb[0].mxu0 0
    %v575 = vpop.f32.mrb[0].mxu0
    %v576 = vadd.f32 0.0, %v575
    %v577 = vpop.f32.mrb[0].mxu0
    %v578 = vadd.f32 0.0, %v577
    %v579 = vpop.f32.mrb[0].mxu0
    %v580 = vpop.f32.mrb[0].mxu0
    %581 = vdwg.mxu0
    %v582 = vadd.f32 %v336, %v535
    %v583 = vadd.f32 %v337, %v537
    %v584 = vadd.f32 %v338, %v576
    %v585 = vadd.f32 %v339, %v578
    %v586 = vmul.f32 %v582, 0.5
    %v587 = vtanh.pop %v586
    %v588 = vmul.f32 %v587, 0.5
    %v589 = vadd.f32 %v588, 0.5
    %v590 = vmul.f32 %v583, 0.5
    %v591 = vtanh.pop %v590
    %v592 = vmul.f32 %v591, 0.5
    %v593 = vadd.f32 %v592, 0.5
    %v594 = vtanh.pop %v584
    %v595 = vmul.f32 %v585, 0.5
    %v596 = vtanh.pop %v595
    %v597 = vmul.f32 %v596, 0.5
    %v598 = vadd.f32 %v597, 0.5
    %v599 = vmul.f32 %v593, 0.0
    %v600 = vmul.f32 %v589, %v594
    %v601 = vadd.f32 %v599, %v600
    %v602 = vtanh.pop %v601
    %v603 = vmul.f32 %v598, %v602
    %v604 = vld [vmem:[#allocation2 + $0x20] sm:$0xff]
    %v605 = vld [vmem:[#allocation2 + $0x28] sm:$0xff]
    %v606 = vld [vmem:[#allocation2 + $0x30] sm:$0xff]
    %v607 = vld [vmem:[#allocation2 + $0x38] sm:$0xff]
    %v608 = vpack.c.bf16 %v603, %v603
    %609 = vmatprep.subr.bf16.mxu0 %v437
    %610 = vmatpush1.bf16.msra.mxu0 %v436
    %611 = vmatprep.subr.bf16.mxu0 %v441
    %612 = vmatpush1.bf16.msra.mxu0 %v440
    %613 = vmatprep.subr.bf16.mxu0 %v445
    %614 = vmatpush1.bf16.msra.mxu0 %v444
    %615 = vmatprep.subr.bf16.mxu0 %v449
    %616 = vmatpush1.bf16.msra.mxu0 %v448
    %617 = vmatprep.subr.bf16.mxu0 %v453
    %618 = vmatpush1.bf16.msra.mxu0 %v452
    %619 = vmatprep.subr.bf16.mxu0 %v457
    %620 = vmatpush1.bf16.msra.mxu0 %v456
    %621 = vmatprep.subr.bf16.mxu0 %v461
    %622 = vmatpush1.bf16.msra.mxu0 %v460
    %623 = vmatprep.subr.bf16.mxu0 %v465
    %624 = vmatpush1.bf16.msra.mxu0 %v464
    %625 = vmatprep.subr.bf16.mxu0 0
    %626 = vmatpush1.bf16.msra.mxu0 0
    %627 = vmatprep.subr.bf16.mxu0 0
    %628 = vmatpush1.bf16.msra.mxu0 0
    %629 = vmatprep.subr.bf16.mxu0 0
    %630 = vmatpush1.bf16.msra.mxu0 0
    %631 = vmatprep.subr.bf16.mxu0 0
    %632 = vmatpush1.bf16.msra.mxu0 0
    %633 = vmatprep.subr.bf16.mxu0 0
    %634 = vmatpush1.bf16.msra.mxu0 0
    %635 = vmatprep.subr.bf16.mxu0 0
    %636 = vmatpush1.bf16.msra.mxu0 0
    %637 = vmatprep.subr.bf16.mxu0 0
    %638 = vmatpush1.bf16.msra.mxu0 0
    %639 = vmatprep.subr.bf16.mxu0 0
    %640 = vmatpush1.bf16.msra.mxu0 0
    %641 = vmatprep.mubr.bf16.mxu0 0
    %642 = vmatmul.mubr.bf16.gmra.mrb[0].mxu0 %v608
    %v643 = vpop.f32.mrb[0].mxu0
    %v644 = vadd.f32 0.0, %v643
    %v645 = vpop.f32.mrb[0].mxu0
    %v646 = vadd.f32 0.0, %v645
    %v647 = vpop.f32.mrb[0].mxu0
    %v648 = vpop.f32.mrb[0].mxu0
    %649 = vdwg.mxu0
    %650 = vmatprep.subr.bf16.mxu0 %v439
    %651 = vmatpush1.bf16.msra.mxu0 %v438
    %652 = vmatprep.subr.bf16.mxu0 %v443
    %653 = vmatpush1.bf16.msra.mxu0 %v442
    %654 = vmatprep.subr.bf16.mxu0 %v447
    %655 = vmatpush1.bf16.msra.mxu0 %v446
    %656 = vmatprep.subr.bf16.mxu0 %v451
    %657 = vmatpush1.bf16.msra.mxu0 %v450
    %658 = vmatprep.subr.bf16.mxu0 %v455
    %659 = vmatpush1.bf16.msra.mxu0 %v454
    %660 = vmatprep.subr.bf16.mxu0 %v459
    %661 = vmatpush1.bf16.msra.mxu0 %v458
    %662 = vmatprep.subr.bf16.mxu0 %v463
    %663 = vmatpush1.bf16.msra.mxu0 %v462
    %664 = vmatprep.subr.bf16.mxu0 %v467
    %665 = vmatpush1.bf16.msra.mxu0 %v466
    %666 = vmatprep.subr.bf16.mxu0 0
    %667 = vmatpush1.bf16.msra.mxu0 0
    %668 = vmatprep.subr.bf16.mxu0 0
    %669 = vmatpush1.bf16.msra.mxu0 0
    %670 = vmatprep.subr.bf16.mxu0 0
    %671 = vmatpush1.bf16.msra.mxu0 0
    %672 = vmatprep.subr.bf16.mxu0 0
    %673 = vmatpush1.bf16.msra.mxu0 0
    %674 = vmatprep.subr.bf16.mxu0 0
    %675 = vmatpush1.bf16.msra.mxu0 0
    %676 = vmatprep.subr.bf16.mxu0 0
    %677 = vmatpush1.bf16.msra.mxu0 0
    %678 = vmatprep.subr.bf16.mxu0 0
    %679 = vmatpush1.bf16.msra.mxu0 0
    %680 = vmatprep.subr.bf16.mxu0 0
    %681 = vmatpush1.bf16.msra.mxu0 0
    %682 = vmatprep.mubr.bf16.mxu0 0
    %683 = vmatmul.mubr.bf16.gmra.mrb[0].mxu0 %v608
    %v684 = vpop.f32.mrb[0].mxu0
    %v685 = vadd.f32 0.0, %v684
    %v686 = vpop.f32.mrb[0].mxu0
    %v687 = vadd.f32 0.0, %v686
    %v688 = vpop.f32.mrb[0].mxu0
    %v689 = vpop.f32.mrb[0].mxu0
    %690 = vdwg.mxu0
    %v691 = vadd.f32 %v604, %v644
    %v692 = vadd.f32 %v605, %v646
    %v693 = vadd.f32 %v606, %v685
    %v694 = vadd.f32 %v607, %v687
    %v695 = vmul.f32 %v691, 0.5
    %v696 = vtanh.pop %v695
    %v697 = vmul.f32 %v696, 0.5
    %v698 = vadd.f32 %v697, 0.5
    %v699 = vmul.f32 %v692, 0.5
    %v700 = vtanh.pop %v699
    %v701 = vmul.f32 %v700, 0.5
    %v702 = vadd.f32 %v701, 0.5
    %v703 = vtanh.pop %v693
    %v704 = vmul.f32 %v694, 0.5
    %v705 = vtanh.pop %v704
    %v706 = vmul.f32 %v705, 0.5
    %v707 = vadd.f32 %v706, 0.5
    %v708 = vmul.f32 %v702, %v601
    %v709 = vmul.f32 %v698, %v703
    %v710 = vadd.f32 %v708, %v709
    %v711 = vtanh.pop %v710
    %v712 = vmul.f32 %v707, %v711
    %v713 = vld [vmem:[#allocation2 + $0x40] sm:$0xff]
    %v714 = vld [vmem:[#allocation2 + $0x48] sm:$0xff]
    %v715 = vld [vmem:[#allocation2 + $0x50] sm:$0xff]
    %v716 = vld [vmem:[#allocation2 + $0x58] sm:$0xff]
    %v717 = vpack.c.bf16 %v712, %v712
    %718 = vmatprep.subr.bf16.mxu0 %v437
    %719 = vmatpush1.bf16.msra.mxu0 %v436
    %720 = vmatprep.subr.bf16.mxu0 %v441
    %721 = vmatpush1.bf16.msra.mxu0 %v440
    %722 = vmatprep.subr.bf16.mxu0 %v445
    %723 = vmatpush1.bf16.msra.mxu0 %v444
    %724 = vmatprep.subr.bf16.mxu0 %v449
    %725 = vmatpush1.bf16.msra.mxu0 %v448
    %726 = vmatprep.subr.bf16.mxu0 %v453
    %727 = vmatpush1.bf16.msra.mxu0 %v452
    %728 = vmatprep.subr.bf16.mxu0 %v457
    %729 = vmatpush1.bf16.msra.mxu0 %v456
    %730 = vmatprep.subr.bf16.mxu0 %v461
    %731 = vmatpush1.bf16.msra.mxu0 %v460
    %732 = vmatprep.subr.bf16.mxu0 %v465
    %733 = vmatpush1.bf16.msra.mxu0 %v464
    %734 = vmatprep.subr.bf16.mxu0 0
    %735 = vmatpush1.bf16.msra.mxu0 0
    %736 = vmatprep.subr.bf16.mxu0 0
    %737 = vmatpush1.bf16.msra.mxu0 0
    %738 = vmatprep.subr.bf16.mxu0 0
    %739 = vmatpush1.bf16.msra.mxu0 0
    %740 = vmatprep.subr.bf16.mxu0 0
    %741 = vmatpush1.bf16.msra.mxu0 0
    %742 = vmatprep.subr.bf16.mxu0 0
    %743 = vmatpush1.bf16.msra.mxu0 0
    %744 = vmatprep.subr.bf16.mxu0 0
    %745 = vmatpush1.bf16.msra.mxu0 0
    %746 = vmatprep.subr.bf16.mxu0 0
    %747 = vmatpush1.bf16.msra.mxu0 0
    %748 = vmatprep.subr.bf16.mxu0 0
    %749 = vmatpush1.bf16.msra.mxu0 0
    %750 = vmatprep.mubr.bf16.mxu0 0
    %751 = vmatmul.mubr.bf16.gmra.mrb[0].mxu0 %v717
    %v752 = vpop.f32.mrb[0].mxu0
    %v753 = vadd.f32 0.0, %v752
    %v754 = vpop.f32.mrb[0].mxu0
    %v755 = vadd.f32 0.0, %v754
    %v756 = vpop.f32.mrb[0].mxu0
    %v757 = vpop.f32.mrb[0].mxu0
    %758 = vdwg.mxu0
    %759 = vmatprep.subr.bf16.mxu0 %v439
    %760 = vmatpush1.bf16.msra.mxu0 %v438
    %761 = vmatprep.subr.bf16.mxu0 %v443
    %762 = vmatpush1.bf16.msra.mxu0 %v442
    %763 = vmatprep.subr.bf16.mxu0 %v447
    %764 = vmatpush1.bf16.msra.mxu0 %v446
    %765 = vmatprep.subr.bf16.mxu0 %v451
    %766 = vmatpush1.bf16.msra.mxu0 %v450
    %767 = vmatprep.subr.bf16.mxu0 %v455
    %768 = vmatpush1.bf16.msra.mxu0 %v454
    %769 = vmatprep.subr.bf16.mxu0 %v459
    %770 = vmatpush1.bf16.msra.mxu0 %v458
    %771 = vmatprep.subr.bf16.mxu0 %v463
    %772 = vmatpush1.bf16.msra.mxu0 %v462
    %773 = vmatprep.subr.bf16.mxu0 %v467
    %774 = vmatpush1.bf16.msra.mxu0 %v466
    %775 = vmatprep.subr.bf16.mxu0 0
    %776 = vmatpush1.bf16.msra.mxu0 0
    %777 = vmatprep.subr.bf16.mxu0 0
    %778 = vmatpush1.bf16.msra.mxu0 0
    %779 = vmatprep.subr.bf16.mxu0 0
    %780 = vmatpush1.bf16.msra.mxu0 0
    %781 = vmatprep.subr.bf16.mxu0 0
    %782 = vmatpush1.bf16.msra.mxu0 0
    %783 = vmatprep.subr.bf16.mxu0 0
    %784 = vmatpush1.bf16.msra.mxu0 0
    %785 = vmatprep.subr.bf16.mxu0 0
    %786 = vmatpush1.bf16.msra.mxu0 0
    %787 = vmatprep.subr.bf16.mxu0 0
    %788 = vmatpush1.bf16.msra.mxu0 0
    %789 = vmatprep.subr.bf16.mxu0 0
    %790 = vmatpush1.bf16.msra.mxu0 0
    %791 = vmatprep.mubr.bf16.mxu0 0
    %792 = vmatmul.mubr.bf16.gmra.mrb[0].mxu0 %v717
    %v793 = vpop.f32.mrb[0].mxu0
    %v794 = vadd.f32 0.0, %v793
    %v795 = vpop.f32.mrb[0].mxu0
    %v796 = vadd.f32 0.0, %v795
    %v797 = vpop.f32.mrb[0].mxu0
    %v798 = vpop.f32.mrb[0].mxu0
    %799 = vdwg.mxu0
    %v800 = vadd.f32 %v713, %v753
    %v801 = vadd.f32 %v714, %v755
    %v802 = vadd.f32 %v715, %v794
    %v803 = vadd.f32 %v716, %v796
    %v804 = vmul.f32 %v800, 0.5
    %v805 = vtanh.pop %v804
    %v806 = vmul.f32 %v805, 0.5
    %v807 = vadd.f32 %v806, 0.5
    %v808 = vmul.f32 %v801, 0.5
    %v809 = vtanh.pop %v808
    %v810 = vmul.f32 %v809, 0.5
    %v811 = vadd.f32 %v810, 0.5
    %v812 = vtanh.pop %v802
    %v813 = vmul.f32 %v803, 0.5
    %v814 = vtanh.pop %v813
    %v815 = vmul.f32 %v814, 0.5
    %v816 = vadd.f32 %v815, 0.5
    %v817 = vmul.f32 %v811, %v710
    %v818 = vmul.f32 %v807, %v812
    %v819 = vadd.f32 %v817, %v818
    %v820 = vtanh.pop %v819
    %v821 = vmul.f32 %v816, %v820
    %v822 = vld [vmem:[#allocation2 + $0x60] sm:$0xff]
    %v823 = vld [vmem:[#allocation2 + $0x68] sm:$0xff]
    %v824 = vld [vmem:[#allocation2 + $0x70] sm:$0xff]
    %v825 = vld [vmem:[#allocation2 + $0x78] sm:$0xff]
    %v826 = vpack.c.bf16 %v821, %v821
    %827 = vmatprep.subr.bf16.mxu0 %v437
    %828 = vmatpush1.bf16.msra.mxu0 %v436
    %829 = vmatprep.subr.bf16.mxu0 %v441
    %830 = vmatpush1.bf16.msra.mxu0 %v440
    %831 = vmatprep.subr.bf16.mxu0 %v445
    %832 = vmatpush1.bf16.msra.mxu0 %v444
    %833 = vmatprep.subr.bf16.mxu0 %v449
    %834 = vmatpush1.bf16.msra.mxu0 %v448
    %835 = vmatprep.subr.bf16.mxu0 %v453
    %836 = vmatpush1.bf16.msra.mxu0 %v452
    %837 = vmatprep.subr.bf16.mxu0 %v457
    %838 = vmatpush1.bf16.msra.mxu0 %v456
    %839 = vmatprep.subr.bf16.mxu0 %v461
    %840 = vmatpush1.bf16.msra.mxu0 %v460
    %841 = vmatprep.subr.bf16.mxu0 %v465
    %842 = vmatpush1.bf16.msra.mxu0 %v464
    %843 = vmatprep.subr.bf16.mxu0 0
    %844 = vmatpush1.bf16.msra.mxu0 0
    %845 = vmatprep.subr.bf16.mxu0 0
    %846 = vmatpush1.bf16.msra.mxu0 0
    %847 = vmatprep.subr.bf16.mxu0 0
    %848 = vmatpush1.bf16.msra.mxu0 0
    %849 = vmatprep.subr.bf16.mxu0 0
    %850 = vmatpush1.bf16.msra.mxu0 0
    %851 = vmatprep.subr.bf16.mxu0 0
    %852 = vmatpush1.bf16.msra.mxu0 0
    %853 = vmatprep.subr.bf16.mxu0 0
    %854 = vmatpush1.bf16.msra.mxu0 0
    %855 = vmatprep.subr.bf16.mxu0 0
    %856 = vmatpush1.bf16.msra.mxu0 0
    %857 = vmatprep.subr.bf16.mxu0 0
    %858 = vmatpush1.bf16.msra.mxu0 0
    %859 = vmatprep.mubr.bf16.mxu0 0
    %860 = vmatmul.mubr.bf16.gmra.mrb[0].mxu0 %v826
    %v861 = vpop.f32.mrb[0].mxu0
    %v862 = vadd.f32 0.0, %v861
    %v863 = vpop.f32.mrb[0].mxu0
    %v864 = vadd.f32 0.0, %v863
    %v865 = vpop.f32.mrb[0].mxu0
    %v866 = vpop.f32.mrb[0].mxu0
    %867 = vdwg.mxu0
    %868 = vmatprep.subr.bf16.mxu0 %v439
    %869 = vmatpush1.bf16.msra.mxu0 %v438
    %870 = vmatprep.subr.bf16.mxu0 %v443
    %871 = vmatpush1.bf16.msra.mxu0 %v442
    %872 = vmatprep.subr.bf16.mxu0 %v447
    %873 = vmatpush1.bf16.msra.mxu0 %v446
    %874 = vmatprep.subr.bf16.mxu0 %v451
    %875 = vmatpush1.bf16.msra.mxu0 %v450
    %876 = vmatprep.subr.bf16.mxu0 %v455
    %877 = vmatpush1.bf16.msra.mxu0 %v454
    %878 = vmatprep.subr.bf16.mxu0 %v459
    %879 = vmatpush1.bf16.msra.mxu0 %v458
    %880 = vmatprep.subr.bf16.mxu0 %v463
    %881 = vmatpush1.bf16.msra.mxu0 %v462
    %882 = vmatprep.subr.bf16.mxu0 %v467
    %883 = vmatpush1.bf16.msra.mxu0 %v466
    %884 = vmatprep.subr.bf16.mxu0 0
    %885 = vmatpush1.bf16.msra.mxu0 0
    %886 = vmatprep.subr.bf16.mxu0 0
    %887 = vmatpush1.bf16.msra.mxu0 0
    %888 = vmatprep.subr.bf16.mxu0 0
    %889 = vmatpush1.bf16.msra.mxu0 0
    %890 = vmatprep.subr.bf16.mxu0 0
    %891 = vmatpush1.bf16.msra.mxu0 0
    %892 = vmatprep.subr.bf16.mxu0 0
    %893 = vmatpush1.bf16.msra.mxu0 0
    %894 = vmatprep.subr.bf16.mxu0 0
    %895 = vmatpush1.bf16.msra.mxu0 0
    %896 = vmatprep.subr.bf16.mxu0 0
    %897 = vmatpush1.bf16.msra.mxu0 0
    %898 = vmatprep.subr.bf16.mxu0 0
    %899 = vmatpush1.bf16.msra.mxu0 0
    %900 = vmatprep.mubr.bf16.mxu0 0
    %901 = vmatmul.mubr.bf16.gmra.mrb[0].mxu0 %v826
    %v902 = vpop.f32.mrb[0].mxu0
    %v903 = vadd.f32 0.0, %v902
    %v904 = vpop.f32.mrb[0].mxu0
    %v905 = vadd.f32 0.0, %v904
    %v906 = vpop.f32.mrb[0].mxu0
    %v907 = vpop.f32.mrb[0].mxu0
    %908 = vdwg.mxu0
    %v909 = vadd.f32 %v822, %v862
    %v910 = vadd.f32 %v823, %v864
    %v911 = vadd.f32 %v824, %v903
    %v912 = vadd.f32 %v825, %v905
    %v913 = vmul.f32 %v909, 0.5
    %v914 = vtanh.pop %v913
    %v915 = vmul.f32 %v914, 0.5
    %v916 = vadd.f32 %v915, 0.5
    %v917 = vmul.f32 %v910, 0.5
    %v918 = vtanh.pop %v917
    %v919 = vmul.f32 %v918, 0.5
    %v920 = vadd.f32 %v919, 0.5
    %v921 = vtanh.pop %v911
    %v922 = vmul.f32 %v912, 0.5
    %v923 = vtanh.pop %v922
    %v924 = vmul.f32 %v923, 0.5
    %v925 = vadd.f32 %v924, 0.5
    %v926 = vmul.f32 %v920, %v819
    %v927 = vmul.f32 %v916, %v921
    %v928 = vadd.f32 %v926, %v927
    %v929 = vtanh.pop %v928
    %v930 = vmul.f32 %v925, %v929
    %v931 = vld [vmem:[#allocation2 + $0x80] sm:$0xff]
    %v932 = vld [vmem:[#allocation2 + $0x88] sm:$0xff]
    %v933 = vld [vmem:[#allocation2 + $0x90] sm:$0xff]
    %v934 = vld [vmem:[#allocation2 + $0x98] sm:$0xff]
    %v935 = vpack.c.bf16 %v930, %v930
    %936 = vmatprep.subr.bf16.mxu0 %v437
    %937 = vmatpush1.bf16.msra.mxu0 %v436
    %938 = vmatprep.subr.bf16.mxu0 %v441
    %939 = vmatpush1.bf16.msra.mxu0 %v440
    %940 = vmatprep.subr.bf16.mxu0 %v445
    %941 = vmatpush1.bf16.msra.mxu0 %v444
    %942 = vmatprep.subr.bf16.mxu0 %v449
    %943 = vmatpush1.bf16.msra.mxu0 %v448
    %944 = vmatprep.subr.bf16.mxu0 %v453
    %945 = vmatpush1.bf16.msra.mxu0 %v452
    %946 = vmatprep.subr.bf16.mxu0 %v457
    %947 = vmatpush1.bf16.msra.mxu0 %v456
    %948 = vmatprep.subr.bf16.mxu0 %v461
    %949 = vmatpush1.bf16.msra.mxu0 %v460
    %950 = vmatprep.subr.bf16.mxu0 %v465
    %951 = vmatpush1.bf16.msra.mxu0 %v464
    %952 = vmatprep.subr.bf16.mxu0 0
    %953 = vmatpush1.bf16.msra.mxu0 0
    %954 = vmatprep.subr.bf16.mxu0 0
    %955 = vmatpush1.bf16.msra.mxu0 0
    %956 = vmatprep.subr.bf16.mxu0 0
    %957 = vmatpush1.bf16.msra.mxu0 0
    %958 = vmatprep.subr.bf16.mxu0 0
    %959 = vmatpush1.bf16.msra.mxu0 0
    %960 = vmatprep.subr.bf16.mxu0 0
    %961 = vmatpush1.bf16.msra.mxu0 0
    %962 = vmatprep.subr.bf16.mxu0 0
    %963 = vmatpush1.bf16.msra.mxu0 0
    %964 = vmatprep.subr.bf16.mxu0 0
    %965 = vmatpush1.bf16.msra.mxu0 0
    %966 = vmatprep.subr.bf16.mxu0 0
    %967 = vmatpush1.bf16.msra.mxu0 0
    %968 = vmatprep.mubr.bf16.mxu0 0
    %969 = vmatmul.mubr.bf16.gmra.mrb[0].mxu0 %v935
    %v970 = vpop.f32.mrb[0].mxu0
    %v971 = vadd.f32 0.0, %v970
    %v972 = vpop.f32.mrb[0].mxu0
    %v973 = vadd.f32 0.0, %v972
    %v974 = vpop.f32.mrb[0].mxu0
    %v975 = vpop.f32.mrb[0].mxu0
    %976 = vdwg.mxu0
    %977 = vmatprep.subr.bf16.mxu0 %v439
    %978 = vmatpush1.bf16.msra.mxu0 %v438
    %979 = vmatprep.subr.bf16.mxu0 %v443
    %980 = vmatpush1.bf16.msra.mxu0 %v442
    %981 = vmatprep.subr.bf16.mxu0 %v447
    %982 = vmatpush1.bf16.msra.mxu0 %v446
    %983 = vmatprep.subr.bf16.mxu0 %v451
    %984 = vmatpush1.bf16.msra.mxu0 %v450
    %985 = vmatprep.subr.bf16.mxu0 %v455
    %986 = vmatpush1.bf16.msra.mxu0 %v454
    %987 = vmatprep.subr.bf16.mxu0 %v459
    %988 = vmatpush1.bf16.msra.mxu0 %v458
    %989 = vmatprep.subr.bf16.mxu0 %v463
    %990 = vmatpush1.bf16.msra.mxu0 %v462
    %991 = vmatprep.subr.bf16.mxu0 %v467
    %992 = vmatpush1.bf16.msra.mxu0 %v466
    %993 = vmatprep.subr.bf16.mxu0 0
    %994 = vmatpush1.bf16.msra.mxu0 0
    %995 = vmatprep.subr.bf16.mxu0 0
    %996 = vmatpush1.bf16.msra.mxu0 0
    %997 = vmatprep.subr.bf16.mxu0 0
    %998 = vmatpush1.bf16.msra.mxu0 0
    %999 = vmatprep.subr.bf16.mxu0 0
    %1000 = vmatpush1.bf16.msra.mxu0 0
    %1001 = vmatprep.subr.bf16.mxu0 0
    %1002 = vmatpush1.bf16.msra.mxu0 0
    %1003 = vmatprep.subr.bf16.mxu0 0
    %1004 = vmatpush1.bf16.msra.mxu0 0
    %1005 = vmatprep.subr.bf16.mxu0 0
    %1006 = vmatpush1.bf16.msra.mxu0 0
    %1007 = vmatprep.subr.bf16.mxu0 0
    %1008 = vmatpush1.bf16.msra.mxu0 0
    %1009 = vmatprep.mubr.bf16.mxu0 0
    %1010 = vmatmul.mubr.bf16.gmra.mrb[0].mxu0 %v935
    %v1011 = vpop.f32.mrb[0].mxu0
    %v1012 = vadd.f32 0.0, %v1011
    %v1013 = vpop.f32.mrb[0].mxu0
    %v1014 = vadd.f32 0.0, %v1013
    %v1015 = vpop.f32.mrb[0].mxu0
    %v1016 = vpop.f32.mrb[0].mxu0
    %1017 = vdwg.mxu0
    %v1018 = vadd.f32 %v931, %v971
    %v1019 = vadd.f32 %v932, %v973
    %v1020 = vadd.f32 %v933, %v1012
    %v1021 = vadd.f32 %v934, %v1014
    %v1022 = vmul.f32 %v1018, 0.5
    %v1023 = vtanh.pop %v1022
    %v1024 = vmul.f32 %v1023, 0.5
    %v1025 = vadd.f32 %v1024, 0.5
    %v1026 = vmul.f32 %v1019, 0.5
    %v1027 = vtanh.pop %v1026
    %v1028 = vmul.f32 %v1027, 0.5
    %v1029 = vadd.f32 %v1028, 0.5
    %v1030 = vtanh.pop %v1020
    %v1031 = vmul.f32 %v1021, 0.5
    %v1032 = vtanh.pop %v1031
    %v1033 = vmul.f32 %v1032, 0.5
    %v1034 = vadd.f32 %v1033, 0.5
    %v1035 = vmul.f32 %v1029, %v928
    %v1036 = vmul.f32 %v1025, %v1030
    %v1037 = vadd.f32 %v1035, %v1036
    %v1038 = vtanh.pop %v1037
    %v1039 = vmul.f32 %v1034, %v1038
    %v1040 = vld [vmem:[#allocation2 + $0xa0] sm:$0xff]
    %v1041 = vld [vmem:[#allocation2 + $0xa8] sm:$0xff]
    %v1042 = vld [vmem:[#allocation2 + $0xb0] sm:$0xff]
    %v1043 = vld [vmem:[#allocation2 + $0xb8] sm:$0xff]
    %v1044 = vpack.c.bf16 %v1039, %v1039
    %1045 = vmatprep.subr.bf16.mxu0 %v437
    %1046 = vmatpush1.bf16.msra.mxu0 %v436
    %1047 = vmatprep.subr.bf16.mxu0 %v441
    %1048 = vmatpush1.bf16.msra.mxu0 %v440
    %1049 = vmatprep.subr.bf16.mxu0 %v445
    %1050 = vmatpush1.bf16.msra.mxu0 %v444
    %1051 = vmatprep.subr.bf16.mxu0 %v449
    %1052 = vmatpush1.bf16.msra.mxu0 %v448
    %1053 = vmatprep.subr.bf16.mxu0 %v453
    %1054 = vmatpush1.bf16.msra.mxu0 %v452
    %1055 = vmatprep.subr.bf16.mxu0 %v457
    %1056 = vmatpush1.bf16.msra.mxu0 %v456
    %1057 = vmatprep.subr.bf16.mxu0 %v461
    %1058 = vmatpush1.bf16.msra.mxu0 %v460
    %1059 = vmatprep.subr.bf16.mxu0 %v465
    %1060 = vmatpush1.bf16.msra.mxu0 %v464
    %1061 = vmatprep.subr.bf16.mxu0 0
    %1062 = vmatpush1.bf16.msra.mxu0 0
    %1063 = vmatprep.subr.bf16.mxu0 0
    %1064 = vmatpush1.bf16.msra.mxu0 0
    %1065 = vmatprep.subr.bf16.mxu0 0
    %1066 = vmatpush1.bf16.msra.mxu0 0
    %1067 = vmatprep.subr.bf16.mxu0 0
    %1068 = vmatpush1.bf16.msra.mxu0 0
    %1069 = vmatprep.subr.bf16.mxu0 0
    %1070 = vmatpush1.bf16.msra.mxu0 0
    %1071 = vmatprep.subr.bf16.mxu0 0
    %1072 = vmatpush1.bf16.msra.mxu0 0
    %1073 = vmatprep.subr.bf16.mxu0 0
    %1074 = vmatpush1.bf16.msra.mxu0 0
    %1075 = vmatprep.subr.bf16.mxu0 0
    %1076 = vmatpush1.bf16.msra.mxu0 0
    %1077 = vmatprep.mubr.bf16.mxu0 0
    %1078 = vmatmul.mubr.bf16.gmra.mrb[0].mxu0 %v1044
    %v1079 = vpop.f32.mrb[0].mxu0
    %v1080 = vadd.f32 0.0, %v1079
    %v1081 = vpop.f32.mrb[0].mxu0
    %v1082 = vadd.f32 0.0, %v1081
    %v1083 = vpop.f32.mrb[0].mxu0
    %v1084 = vpop.f32.mrb[0].mxu0
    %1085 = vdwg.mxu0
    %1086 = vmatprep.subr.bf16.mxu0 %v439
    %1087 = vmatpush1.bf16.msra.mxu0 %v438
    %1088 = vmatprep.subr.bf16.mxu0 %v443
    %1089 = vmatpush1.bf16.msra.mxu0 %v442
    %1090 = vmatprep.subr.bf16.mxu0 %v447
    %1091 = vmatpush1.bf16.msra.mxu0 %v446
    %1092 = vmatprep.subr.bf16.mxu0 %v451
    %1093 = vmatpush1.bf16.msra.mxu0 %v450
    %1094 = vmatprep.subr.bf16.mxu0 %v455
    %1095 = vmatpush1.bf16.msra.mxu0 %v454
    %1096 = vmatprep.subr.bf16.mxu0 %v459
    %1097 = vmatpush1.bf16.msra.mxu0 %v458
    %1098 = vmatprep.subr.bf16.mxu0 %v463
    %1099 = vmatpush1.bf16.msra.mxu0 %v462
    %1100 = vmatprep.subr.bf16.mxu0 %v467
    %1101 = vmatpush1.bf16.msra.mxu0 %v466
    %1102 = vmatprep.subr.bf16.mxu0 0
    %1103 = vmatpush1.bf16.msra.mxu0 0
    %1104 = vmatprep.subr.bf16.mxu0 0
    %1105 = vmatpush1.bf16.msra.mxu0 0
    %1106 = vmatprep.subr.bf16.mxu0 0
    %1107 = vmatpush1.bf16.msra.mxu0 0
    %1108 = vmatprep.subr.bf16.mxu0 0
    %1109 = vmatpush1.bf16.msra.mxu0 0
    %1110 = vmatprep.subr.bf16.mxu0 0
    %1111 = vmatpush1.bf16.msra.mxu0 0
    %1112 = vmatprep.subr.bf16.mxu0 0
    %1113 = vmatpush1.bf16.msra.mxu0 0
    %1114 = vmatprep.subr.bf16.mxu0 0
    %1115 = vmatpush1.bf16.msra.mxu0 0
    %1116 = vmatprep.subr.bf16.mxu0 0
    %1117 = vmatpush1.bf16.msra.mxu0 0
    %1118 = vmatprep.mubr.bf16.mxu0 0
    %1119 = vmatmul.mubr.bf16.gmra.mrb[0].mxu0 %v1044
    %v1120 = vpop.f32.mrb[0].mxu0
    %v1121 = vadd.f32 0.0, %v1120
    %v1122 = vpop.f32.mrb[0].mxu0
    %v1123 = vadd.f32 0.0, %v1122
    %v1124 = vpop.f32.mrb[0].mxu0
    %v1125 = vpop.f32.mrb[0].mxu0
    %1126 = vdwg.mxu0
    %v1127 = vadd.f32 %v1040, %v1080
    %v1128 = vadd.f32 %v1041, %v1082
    %v1129 = vadd.f32 %v1042, %v1121
    %v1130 = vadd.f32 %v1043, %v1123
    %v1131 = vmul.f32 %v1127, 0.5
    %v1132 = vtanh.pop %v1131
    %v1133 = vmul.f32 %v1132, 0.5
    %v1134 = vadd.f32 %v1133, 0.5
    %v1135 = vmul.f32 %v1128, 0.5
    %v1136 = vtanh.pop %v1135
    %v1137 = vmul.f32 %v1136, 0.5
    %v1138 = vadd.f32 %v1137, 0.5
    %v1139 = vtanh.pop %v1129
    %v1140 = vmul.f32 %v1130, 0.5
    %v1141 = vtanh.pop %v1140
    %v1142 = vmul.f32 %v1141, 0.5
    %v1143 = vadd.f32 %v1142, 0.5
    %v1144 = vmul.f32 %v1138, %v1037
    %v1145 = vmul.f32 %v1134, %v1139
    %v1146 = vadd.f32 %v1144, %v1145
    %v1147 = vtanh.pop %v1146
    %v1148 = vmul.f32 %v1143, %v1147
    %v1149 = vld [vmem:[#allocation2 + $0xc0] sm:$0xff]
    %v1150 = vld [vmem:[#allocation2 + $0xc8] sm:$0xff]
    %v1151 = vld [vmem:[#allocation2 + $0xd0] sm:$0xff]
    %v1152 = vld [vmem:[#allocation2 + $0xd8] sm:$0xff]
    %v1153 = vpack.c.bf16 %v1148, %v1148
    %1154 = vmatprep.subr.bf16.mxu0 %v437
    %1155 = vmatpush1.bf16.msra.mxu0 %v436
    %1156 = vmatprep.subr.bf16.mxu0 %v441
    %1157 = vmatpush1.bf16.msra.mxu0 %v440
    %1158 = vmatprep.subr.bf16.mxu0 %v445
    %1159 = vmatpush1.bf16.msra.mxu0 %v444
    %1160 = vmatprep.subr.bf16.mxu0 %v449
    %1161 = vmatpush1.bf16.msra.mxu0 %v448
    %1162 = vmatprep.subr.bf16.mxu0 %v453
    %1163 = vmatpush1.bf16.msra.mxu0 %v452
    %1164 = vmatprep.subr.bf16.mxu0 %v457
    %1165 = vmatpush1.bf16.msra.mxu0 %v456
    %1166 = vmatprep.subr.bf16.mxu0 %v461
    %1167 = vmatpush1.bf16.msra.mxu0 %v460
    %1168 = vmatprep.subr.bf16.mxu0 %v465
    %1169 = vmatpush1.bf16.msra.mxu0 %v464
    %1170 = vmatprep.subr.bf16.mxu0 0
    %1171 = vmatpush1.bf16.msra.mxu0 0
    %1172 = vmatprep.subr.bf16.mxu0 0
    %1173 = vmatpush1.bf16.msra.mxu0 0
    %1174 = vmatprep.subr.bf16.mxu0 0
    %1175 = vmatpush1.bf16.msra.mxu0 0
    %1176 = vmatprep.subr.bf16.mxu0 0
    %1177 = vmatpush1.bf16.msra.mxu0 0
    %1178 = vmatprep.subr.bf16.mxu0 0
    %1179 = vmatpush1.bf16.msra.mxu0 0
    %1180 = vmatprep.subr.bf16.mxu0 0
    %1181 = vmatpush1.bf16.msra.mxu0 0
    %1182 = vmatprep.subr.bf16.mxu0 0
    %1183 = vmatpush1.bf16.msra.mxu0 0
    %1184 = vmatprep.subr.bf16.mxu0 0
    %1185 = vmatpush1.bf16.msra.mxu0 0
    %1186 = vmatprep.mubr.bf16.mxu0 0
    %1187 = vmatmul.mubr.bf16.gmra.mrb[0].mxu0 %v1153
    %v1188 = vpop.f32.mrb[0].mxu0
    %v1189 = vadd.f32 0.0, %v1188
    %v1190 = vpop.f32.mrb[0].mxu0
    %v1191 = vadd.f32 0.0, %v1190
    %v1192 = vpop.f32.mrb[0].mxu0
    %v1193 = vpop.f32.mrb[0].mxu0
    %1194 = vdwg.mxu0
    %1195 = vmatprep.subr.bf16.mxu0 %v439
    %1196 = vmatpush1.bf16.msra.mxu0 %v438
    %1197 = vmatprep.subr.bf16.mxu0 %v443
    %1198 = vmatpush1.bf16.msra.mxu0 %v442
    %1199 = vmatprep.subr.bf16.mxu0 %v447
    %1200 = vmatpush1.bf16.msra.mxu0 %v446
    %1201 = vmatprep.subr.bf16.mxu0 %v451
    %1202 = vmatpush1.bf16.msra.mxu0 %v450
    %1203 = vmatprep.subr.bf16.mxu0 %v455
    %1204 = vmatpush1.bf16.msra.mxu0 %v454
    %1205 = vmatprep.subr.bf16.mxu0 %v459
    %1206 = vmatpush1.bf16.msra.mxu0 %v458
    %1207 = vmatprep.subr.bf16.mxu0 %v463
    %1208 = vmatpush1.bf16.msra.mxu0 %v462
    %1209 = vmatprep.subr.bf16.mxu0 %v467
    %1210 = vmatpush1.bf16.msra.mxu0 %v466
    %1211 = vmatprep.subr.bf16.mxu0 0
    %1212 = vmatpush1.bf16.msra.mxu0 0
    %1213 = vmatprep.subr.bf16.mxu0 0
    %1214 = vmatpush1.bf16.msra.mxu0 0
    %1215 = vmatprep.subr.bf16.mxu0 0
    %1216 = vmatpush1.bf16.msra.mxu0 0
    %1217 = vmatprep.subr.bf16.mxu0 0
    %1218 = vmatpush1.bf16.msra.mxu0 0
    %1219 = vmatprep.subr.bf16.mxu0 0
    %1220 = vmatpush1.bf16.msra.mxu0 0
    %1221 = vmatprep.subr.bf16.mxu0 0
    %1222 = vmatpush1.bf16.msra.mxu0 0
    %1223 = vmatprep.subr.bf16.mxu0 0
    %1224 = vmatpush1.bf16.msra.mxu0 0
    %1225 = vmatprep.subr.bf16.mxu0 0
    %1226 = vmatpush1.bf16.msra.mxu0 0
    %1227 = vmatprep.mubr.bf16.mxu0 0
    %1228 = vmatmul.mubr.bf16.gmra.mrb[0].mxu0 %v1153
    %v1229 = vpop.f32.mrb[0].mxu0
    %v1230 = vadd.f32 0.0, %v1229
    %v1231 = vpop.f32.mrb[0].mxu0
    %v1232 = vadd.f32 0.0, %v1231
    %v1233 = vpop.f32.mrb[0].mxu0
    %v1234 = vpop.f32.mrb[0].mxu0
    %1235 = vdwg.mxu0
    %v1236 = vadd.f32 %v1149, %v1189
    %v1237 = vadd.f32 %v1150, %v1191
    %v1238 = vadd.f32 %v1151, %v1230
    %v1239 = vadd.f32 %v1152, %v1232
    %v1240 = vmul.f32 %v1236, 0.5
    %v1241 = vtanh.pop %v1240
    %v1242 = vmul.f32 %v1241, 0.5
    %v1243 = vadd.f32 %v1242, 0.5
    %v1244 = vmul.f32 %v1237, 0.5
    %v1245 = vtanh.pop %v1244
    %v1246 = vmul.f32 %v1245, 0.5
    %v1247 = vadd.f32 %v1246, 0.5
    %v1248 = vtanh.pop %v1238
    %v1249 = vmul.f32 %v1239, 0.5
    %v1250 = vtanh.pop %v1249
    %v1251 = vmul.f32 %v1250, 0.5
    %v1252 = vadd.f32 %v1251, 0.5
    %v1253 = vmul.f32 %v1247, %v1146
    %v1254 = vmul.f32 %v1243, %v1248
    %v1255 = vadd.f32 %v1253, %v1254
    %v1256 = vtanh.pop %v1255
    %v1257 = vmul.f32 %v1252, %v1256
    %v1258 = vld [vmem:[#allocation2 + $0xe0] sm:$0xff]
    %v1259 = vld [vmem:[#allocation2 + $0xe8] sm:$0xff]
    %v1260 = vld [vmem:[#allocation2 + $0xf0] sm:$0xff]
    %v1261 = vld [vmem:[#allocation2 + $0xf8] sm:$0xff]
    %v1262 = vpack.c.bf16 %v1257, %v1257
    %1263 = vmatprep.subr.bf16.mxu0 %v437
    %1264 = vmatpush1.bf16.msra.mxu0 %v436
    %1265 = vmatprep.subr.bf16.mxu0 %v441
    %1266 = vmatpush1.bf16.msra.mxu0 %v440
    %1267 = vmatprep.subr.bf16.mxu0 %v445
    %1268 = vmatpush1.bf16.msra.mxu0 %v444
    %1269 = vmatprep.subr.bf16.mxu0 %v449
    %1270 = vmatpush1.bf16.msra.mxu0 %v448
    %1271 = vmatprep.subr.bf16.mxu0 %v453
    %1272 = vmatpush1.bf16.msra.mxu0 %v452
    %1273 = vmatprep.subr.bf16.mxu0 %v457
    %1274 = vmatpush1.bf16.msra.mxu0 %v456
    %1275 = vmatprep.subr.bf16.mxu0 %v461
    %1276 = vmatpush1.bf16.msra.mxu0 %v460
    %1277 = vmatprep.subr.bf16.mxu0 %v465
    %1278 = vmatpush1.bf16.msra.mxu0 %v464
    %1279 = vmatprep.subr.bf16.mxu0 0
    %1280 = vmatpush1.bf16.msra.mxu0 0
    %1281 = vmatprep.subr.bf16.mxu0 0
    %1282 = vmatpush1.bf16.msra.mxu0 0
    %1283 = vmatprep.subr.bf16.mxu0 0
    %1284 = vmatpush1.bf16.msra.mxu0 0
    %1285 = vmatprep.subr.bf16.mxu0 0
    %1286 = vmatpush1.bf16.msra.mxu0 0
    %1287 = vmatprep.subr.bf16.mxu0 0
    %1288 = vmatpush1.bf16.msra.mxu0 0
    %1289 = vmatprep.subr.bf16.mxu0 0
    %1290 = vmatpush1.bf16.msra.mxu0 0
    %1291 = vmatprep.subr.bf16.mxu0 0
    %1292 = vmatpush1.bf16.msra.mxu0 0
    %1293 = vmatprep.subr.bf16.mxu0 0
    %1294 = vmatpush1.bf16.msra.mxu0 0
    %1295 = vmatprep.mubr.bf16.mxu0 0
    %1296 = vmatmul.mubr.bf16.gmra.mrb[0].mxu0 %v1262
    %v1297 = vpop.f32.mrb[0].mxu0
    %v1298 = vadd.f32 0.0, %v1297
    %v1299 = vpop.f32.mrb[0].mxu0
    %v1300 = vadd.f32 0.0, %v1299
    %v1301 = vpop.f32.mrb[0].mxu0
    %v1302 = vpop.f32.mrb[0].mxu0
    %1303 = vdwg.mxu0
    %1304 = vmatprep.subr.bf16.mxu0 %v439
    %1305 = vmatpush1.bf16.msra.mxu0 %v438
    %1306 = vmatprep.subr.bf16.mxu0 %v443
    %1307 = vmatpush1.bf16.msra.mxu0 %v442
    %1308 = vmatprep.subr.bf16.mxu0 %v447
    %1309 = vmatpush1.bf16.msra.mxu0 %v446
    %1310 = vmatprep.subr.bf16.mxu0 %v451
    %1311 = vmatpush1.bf16.msra.mxu0 %v450
    %1312 = vmatprep.subr.bf16.mxu0 %v455
    %1313 = vmatpush1.bf16.msra.mxu0 %v454
    %1314 = vmatprep.subr.bf16.mxu0 %v459
    %1315 = vmatpush1.bf16.msra.mxu0 %v458
    %1316 = vmatprep.subr.bf16.mxu0 %v463
    %1317 = vmatpush1.bf16.msra.mxu0 %v462
    %1318 = vmatprep.subr.bf16.mxu0 %v467
    %1319 = vmatpush1.bf16.msra.mxu0 %v466
    %1320 = vmatprep.subr.bf16.mxu0 0
    %1321 = vmatpush1.bf16.msra.mxu0 0
    %1322 = vmatprep.subr.bf16.mxu0 0
    %1323 = vmatpush1.bf16.msra.mxu0 0
    %1324 = vmatprep.subr.bf16.mxu0 0
    %1325 = vmatpush1.bf16.msra.mxu0 0
    %1326 = vmatprep.subr.bf16.mxu0 0
    %1327 = vmatpush1.bf16.msra.mxu0 0
    %1328 = vmatprep.subr.bf16.mxu0 0
    %1329 = vmatpush1.bf16.msra.mxu0 0
    %1330 = vmatprep.subr.bf16.mxu0 0
    %1331 = vmatpush1.bf16.msra.mxu0 0
    %1332 = vmatprep.subr.bf16.mxu0 0
    %1333 = vmatpush1.bf16.msra.mxu0 0
    %1334 = vmatprep.subr.bf16.mxu0 0
    %1335 = vmatpush1.bf16.msra.mxu0 0
    %1336 = vmatprep.mubr.bf16.mxu0 0
    %1337 = vmatmul.mubr.bf16.gmra.mrb[0].mxu0 %v1262
    %v1338 = vpop.f32.mrb[0].mxu0
    %v1339 = vadd.f32 0.0, %v1338
    %v1340 = vpop.f32.mrb[0].mxu0
    %v1341 = vadd.f32 0.0, %v1340
    %v1342 = vpop.f32.mrb[0].mxu0
    %v1343 = vpop.f32.mrb[0].mxu0
    %1344 = vdwg.mxu0
    %v1345 = vadd.f32 %v1258, %v1298
    %v1346 = vadd.f32 %v1259, %v1300
    %v1347 = vadd.f32 %v1260, %v1339
    %v1348 = vadd.f32 %v1261, %v1341
    %v1349 = vmul.f32 %v1345, 0.5
    %v1350 = vtanh.pop %v1349
    %v1351 = vmul.f32 %v1350, 0.5
    %v1352 = vadd.f32 %v1351, 0.5
    %v1353 = vmul.f32 %v1346, 0.5
    %v1354 = vtanh.pop %v1353
    %v1355 = vmul.f32 %v1354, 0.5
    %v1356 = vadd.f32 %v1355, 0.5
    %v1357 = vtanh.pop %v1347
    %v1358 = vmul.f32 %v1348, 0.5
    %v1359 = vtanh.pop %v1358
    %v1360 = vmul.f32 %v1359, 0.5
    %v1361 = vadd.f32 %v1360, 0.5
    %v1362 = vmul.f32 %v1356, %v1255
    %v1363 = vmul.f32 %v1352, %v1357
    %v1364 = vadd.f32 %v1362, %v1363
    %v1365 = vtanh.pop %v1364
    %v1366 = vmul.f32 %v1361, %v1365
    %v1367 = vpack.c.bf16 %v1366, %v1366
    %v1368 = vld [vmem:[%s4] sm:$0xf]
    %v1369 = vld [vmem:[%s4 + $0x4] sm:$0xf]
    %v1370 = vld [vmem:[%s4 + $0x8] sm:$0xf]
    %v1371 = vld [vmem:[%s4 + $0xc] sm:$0xf]
    %v1372 = vld [vmem:[%s4 + $0x10] sm:$0xf]
    %v1373 = vld [vmem:[%s4 + $0x14] sm:$0xf]
    %v1374 = vld [vmem:[%s4 + $0x18] sm:$0xf]
    %v1375 = vld [vmem:[%s4 + $0x1c] sm:$0xf]
    %v1376 = vld [vmem:[%s4 + $0x20] sm:$0xf]
    %v1377 = vld [vmem:[%s4 + $0x24] sm:$0xf]
    %v1378 = vld [vmem:[%s4 + $0x28] sm:$0xf]
    %v1379 = vld [vmem:[%s4 + $0x2c] sm:$0xf]
    %v1380 = vld [vmem:[%s4 + $0x30] sm:$0xf]
    %v1381 = vld [vmem:[%s4 + $0x34] sm:$0xf]
    %v1382 = vld [vmem:[%s4 + $0x38] sm:$0xf]
    %v1383 = vld [vmem:[%s4 + $0x3c] sm:$0xf]
    %v1384 = vld [vmem:[%s5] sm:$0x1]
    %v1386 = vlaneseq
    %v1387 = vshrl.u32 %v1386, 7
    %v1388 = vsub.s32 0, %v1387
    %v1389 = vrot.slane %v1384, %v1388
    %v1407 = vunpack.c.l.b16 %v1368
    %v1408 = vunpack.c.l.b16 %v1369
    %v1409 = vunpack.c.l.b16 %v1370
    %v1410 = vunpack.c.l.b16 %v1371
    %v1411 = vunpack.c.l.b16 %v1372
    %v1412 = vunpack.c.l.b16 %v1373
    %v1413 = vunpack.c.l.b16 %v1374
    %v1414 = vunpack.c.l.b16 %v1375
    %v1415 = vunpack.c.l.b16 %v1376
    %v1416 = vunpack.c.l.b16 %v1377
    %v1417 = vunpack.c.l.b16 %v1378
    %v1418 = vunpack.c.l.b16 %v1379
    %v1419 = vunpack.c.l.b16 %v1380
    %v1420 = vunpack.c.l.b16 %v1381
    %v1421 = vunpack.c.l.b16 %v1382
    %v1422 = vunpack.c.l.b16 %v1383
    %v1423 = vpack.c.b16 %v1408, %v1407
    %v1424 = vpack.c.b16 %v1410, %v1409
    %v1425 = vpack.c.b16 %v1412, %v1411
    %v1426 = vpack.c.b16 %v1414, %v1413
    %v1427 = vpack.c.b16 %v1416, %v1415
    %v1428 = vpack.c.b16 %v1418, %v1417
    %v1429 = vpack.c.b16 %v1420, %v1419
    %v1430 = vpack.c.b16 %v1422, %v1421
    %1439 = vmatprep.subr.bf16.mxu0 0
    %1440 = vmatpush1.bf16.msra.mxu0 %v1423
    %1441 = vmatprep.subr.bf16.mxu0 0
    %1442 = vmatpush1.bf16.msra.mxu0 %v1424
    %1443 = vmatprep.subr.bf16.mxu0 0
    %1444 = vmatpush1.bf16.msra.mxu0 %v1425
    %1445 = vmatprep.subr.bf16.mxu0 0
    %1446 = vmatpush1.bf16.msra.mxu0 %v1426
    %1447 = vmatprep.subr.bf16.mxu0 0
    %1448 = vmatpush1.bf16.msra.mxu0 %v1427
    %1449 = vmatprep.subr.bf16.mxu0 0
    %1450 = vmatpush1.bf16.msra.mxu0 %v1428
    %1451 = vmatprep.subr.bf16.mxu0 0
    %1452 = vmatpush1.bf16.msra.mxu0 %v1429
    %1453 = vmatprep.subr.bf16.mxu0 0
    %1454 = vmatpush1.bf16.msra.mxu0 %v1430
    %1455 = vmatprep.subr.bf16.mxu0 0
    %1456 = vmatpush1.bf16.msra.mxu0 0
    %1457 = vmatprep.subr.bf16.mxu0 0
    %1458 = vmatpush1.bf16.msra.mxu0 0
    %1459 = vmatprep.subr.bf16.mxu0 0
    %1460 = vmatpush1.bf16.msra.mxu0 0
    %1461 = vmatprep.subr.bf16.mxu0 0
    %1462 = vmatpush1.bf16.msra.mxu0 0
    %1463 = vmatprep.subr.bf16.mxu0 0
    %1464 = vmatpush1.bf16.msra.mxu0 0
    %1465 = vmatprep.subr.bf16.mxu0 0
    %1466 = vmatpush1.bf16.msra.mxu0 0
    %1467 = vmatprep.subr.bf16.mxu0 0
    %1468 = vmatpush1.bf16.msra.mxu0 0
    %1469 = vmatprep.subr.bf16.mxu0 0
    %1470 = vmatpush1.bf16.msra.mxu0 0
    %1471 = vmatprep.mubr.bf16.mxu0 0
    %1472 = vmatmul.mubr.bf16.gmra.mrb[0].mxu0 %v1367
    %v1473 = vpop.f32.mrb[0].mxu0
    %v1474 = vadd.f32 %v1389, %v1473
    %v1475 = vpop.f32.mrb[0].mxu0
    %v1476 = vpop.f32.mrb[0].mxu0
    %v1477 = vpop.f32.mrb[0].mxu0
    %1478 = vdwg.mxu0
    %1479 = vst [vmem:[%s6] sm:$0xff] %v1474
    // Predicated region
    $region30: #{prediction_model_forward.1} parent=1 // pred_check
      _
    $region31: #{prediction_model_forward.1} parent=1 // pred_check_branch
      %1481 = sbr.rel (0) target = $region33
    $region32: #{prediction_model_forward.1} parent=1 // pred_region
      _
    $region33: #{prediction_model_forward.1} parent=1 // pred_fallthru
      _
    // Predicated region
    $region34: #{prediction_model_forward.1} parent=1 // pred_check
      _
    $region35: #{prediction_model_forward.1} parent=1 // pred_check_branch
      %1483 = sbr.rel (0) target = $region37
    $region36: #{prediction_model_forward.1} parent=1 // pred_region
      _
    $region37: #{prediction_model_forward.1} parent=1 // pred_fallthru
      _
    %1484 = vsyncpa [#allocation4], 1

</llo_original>
